<compile_context>
chip_gen: v7x
topology: tpu7x:2x2x1
jax: 0.10.0
libtpu: 0.0.40
codegen_flags: <defaults>
</compile_context>

<pallas_src>
import functools
import math

import jax
import jax.numpy as jnp
from jax.experimental import pallas as pl
from jax.experimental.pallas import tpu as pltpu

# ----------------------------------------------------------------------------
# Pallas kernels
# ----------------------------------------------------------------------------
_TM_CAP = 256    # dense matmul tile caps
_TN_CAP = 256
_TK_CAP = 2304   # full-extent K blocks up to this size (no K padding / no k grid)
_TR = 512        # row tile cap for the elementwise affine kernel


def _round_up(x, m):
    return (x + m - 1) // m * m


def _pick_div(padded, cap, step=128):
    """Largest multiple of `step` <= cap that divides `padded` (padded % step == 0)."""
    t = max(step, (min(cap, padded) // step) * step)
    while padded % t:
        t -= step
    return t


def _matmul_kernel(a_ref, b_ref, bias_ref, o_ref, st_ref):
    # bf16 x bf16 -> f32 accumulation directly into the resident output block.
    # At the last k step the per-(i,j)-block BN statistics (col sum / sum-of-squares)
    # are written to a tiny side output, so BatchNorm does not re-read the conv output.
    k = pl.program_id(2)
    part = jnp.dot(a_ref[...], b_ref[...], preferred_element_type=jnp.float32)

    @pl.when(k == 0)
    def _first():
        o_ref[...] = part + bias_ref[...]          # fused bias epilogue (added once)

    @pl.when(k != 0)
    def _rest():
        o_ref[...] += part

    @pl.when(k == pl.num_programs(2) - 1)
    def _stats():
        y = o_ref[...]
        s1 = jnp.sum(y, axis=0, keepdims=True)
        s2 = jnp.sum(y * y, axis=0, keepdims=True)
        st_ref[0] = jnp.concatenate([s1, s2], axis=0)


@functools.partial(jax.jit, static_argnames=("tm", "tn", "tk"))
def _matmul_padded(a, b, bias, tm, tn, tk):
    M, K = a.shape
    _, N = b.shape
    gi, gj, gk = M // tm, N // tn, K // tk
    cost = pl.CostEstimate(flops=2 * M * N * K, transcendentals=0,
                           bytes_accessed=M * K * 2 + K * N * 2 + M * N * 4)
    return pl.pallas_call(
        _matmul_kernel,
        out_shape=(jax.ShapeDtypeStruct((M, N), jnp.float32),
                   jax.ShapeDtypeStruct((gi, 2, N), jnp.float32)),
        grid_spec=pltpu.PrefetchScalarGridSpec(
            num_scalar_prefetch=0,
            grid=(gi, gj, gk),
            in_specs=[pl.BlockSpec((tm, tk), lambda i, j, k: (i, k)),
                      pl.BlockSpec((tk, tn), lambda i, j, k: (k, j)),
                      pl.BlockSpec((1, tn), lambda i, j, k: (0, j))],
            out_specs=[pl.BlockSpec((tm, tn), lambda i, j, k: (i, j)),
                       pl.BlockSpec((1, 2, tn), lambda i, j, k: (i, 0, j))],
        ),
        compiler_params=pltpu.CompilerParams(
            dimension_semantics=("parallel", "parallel", "arbitrary")),
        cost_estimate=cost,
    )(a, b, bias)


def matmul_bias(a, b, bias=None, want_stats=False):
    """(M, K) @ (K, N) (+ bias) -> f32.  Big GEMMs go to the Pallas MXU kernel
    (bf16 inputs, f32 accumulation, fused bias + BN-stat epilogue); tiny GEMMs go to
    plain XLA to avoid padding/launch overhead."""
    M, K = a.shape
    N = b.shape[1]
    if M < 64 or N < 64 or K < 64:
        y = jnp.dot(a.astype(jnp.bfloat16), b.astype(jnp.bfloat16),
                    preferred_element_type=jnp.float32)
        if bias is not None:
            y = y + bias.astype(jnp.float32)
        return (y, None) if want_stats else y
    a16 = a.astype(jnp.bfloat16)
    b16 = b.astype(jnp.bfloat16)

    # Tile selection: prefer full-extent blocks (no padding, fewer grid steps).
    if M % 8 == 0 and M <= _TM_CAP:
        tm, Mp = M, M
    else:
        tm = _TM_CAP if M >= _TM_CAP else _round_up(M, 8)
        Mp = _round_up(M, tm)
    if N <= _TN_CAP:
        tn, Np = N, N
    else:
        Np = _round_up(N, 128)
        tn = _pick_div(Np, _TN_CAP)
    if K <= _TK_CAP:
        tk, Kp = K, K
    else:
        Kp = _round_up(K, 128)
        tk = _pick_div(Kp, _TK_CAP)
    # v7x: make sure the parallel (i, j) grid has >= 2 blocks so both TCs run.
    if (Mp // tm) * (Np // tn) < 2:
        if tn % 256 == 0:
            tn //= 2
        elif tm % 16 == 0:
            tm //= 2

    if (Mp, Kp) != (M, K):
        a16 = jnp.pad(a16, ((0, Mp - M), (0, Kp - K)))
    if (Kp, Np) != (K, N):
        b16 = jnp.pad(b16, ((0, Kp - K), (0, Np - N)))
    if bias is None:
        brow = jnp.zeros((1, Np), jnp.float32)
    else:
        brow = bias.astype(jnp.float32).reshape(1, N)
        if Np != N:
            brow = jnp.pad(brow, ((0, 0), (0, Np - N)))
    y, stats = _matmul_padded(a16, b16, brow, tm=tm, tn=tn, tk=tk)
    if (Mp, Np) != (M, N):
        y = y[:M, :N]
    if want_stats:
        stats = stats.sum(axis=0) if (Mp == M and Np == N) else None
        return y, stats
    return y


def _grouped_bd_kernel(a_ref, w_ref, o_ref, st_ref):
    # One lane-dense dot per (row-block, group-block): (tm, bg*Kg) @ (bg*Kg, 128).
    y = jnp.dot(a_ref[...], w_ref[...], preferred_element_type=jnp.float32)
    o_ref[...] = y
    s1 = jnp.sum(y, axis=0, keepdims=True)
    s2 = jnp.sum(y * y, axis=0, keepdims=True)
    st_ref[0] = jnp.concatenate([s1, s2], axis=0)


@functools.partial(jax.jit, static_argnames=("tm", "kb", "nb"))
def _grouped_bd_mm(a, wbd, tm, kb, nb):
    M = a.shape[0]
    nj = wbd.shape[0] // kb
    gi = M // tm
    cost = pl.CostEstimate(flops=2 * M * nj * kb * nb, transcendentals=0,
                           bytes_accessed=a.size * 2 + wbd.size * 2 + M * nj * nb * 4)
    return pl.pallas_call(
        _grouped_bd_kernel,
        out_shape=(jax.ShapeDtypeStruct((M, nj * nb), jnp.float32),
                   jax.ShapeDtypeStruct((gi, 2, nj * nb), jnp.float32)),
        grid_spec=pltpu.PrefetchScalarGridSpec(
            num_scalar_prefetch=0,
            grid=(gi, nj),
            in_specs=[pl.BlockSpec((tm, kb), lambda i, j: (i, j)),
                      pl.BlockSpec((kb, nb), lambda i, j: (j, 0))],
            out_specs=[pl.BlockSpec((tm, nb), lambda i, j: (i, j)),
                       pl.BlockSpec((1, 2, nb), lambda i, j: (i, 0, j))],
        ),
        compiler_params=pltpu.CompilerParams(
            dimension_semantics=("parallel", "parallel")),
        cost_estimate=cost,
    )(a, wbd)


def _affine_kernel(x_ref, s_ref, b_ref, o_ref, *, relu):
    y = x_ref[...] * s_ref[...] + b_ref[...]
    if relu:
        y = jnp.maximum(y, 0.0)
    o_ref[...] = y.astype(o_ref.dtype)


@functools.partial(jax.jit, static_argnames=("relu", "tr", "out_dtype"))
def _affine_padded(x, s, b, relu, tr, out_dtype):
    R, C = x.shape
    return pl.pallas_call(
        functools.partial(_affine_kernel, relu=relu),
        out_shape=jax.ShapeDtypeStruct((R, C), out_dtype),
        grid_spec=pltpu.PrefetchScalarGridSpec(
            num_scalar_prefetch=0,
            grid=(R // tr,),
            in_specs=[pl.BlockSpec((tr, C), lambda r: (r, 0)),
                      pl.BlockSpec((1, C), lambda r: (0, 0)),
                      pl.BlockSpec((1, C), lambda r: (0, 0))],
            out_specs=pl.BlockSpec((tr, C), lambda r: (r, 0)),
        ),
        compiler_params=pltpu.CompilerParams(dimension_semantics=("parallel",)),
    )(x, s, b)


def affine_act(x, scale, shift, relu=False, out_dtype=jnp.float32):
    """Per-channel y = x*scale + shift (+ optional ReLU) on NHWC via Pallas."""
    N, H, W, C = x.shape
    R = N * H * W
    x2 = x.astype(jnp.float32).reshape(R, C)
    s = scale.astype(jnp.float32).reshape(1, C)
    b = shift.astype(jnp.float32).reshape(1, C)
    if R < 64:                                    # tail feature maps: not worth a launch
        y = x2 * s + b
        if relu:
            y = jnp.maximum(y, 0.0)
        return y.astype(out_dtype).reshape(N, H, W, C)
    # Lane-dense folding for narrow channel counts (e.g. C=64 -> (R/2, 128)).
    f = 1
    if C < 128 and 128 % C == 0:
        f = 128 // C
        while f > 1 and R % f:
            f //= 2
    if f > 1:
        xk = x2.reshape(R // f, f * C)
        sk = jnp.tile(s, (1, f))
        bk = jnp.tile(b, (1, f))
    else:
        xk, sk, bk = x2, s, b
    Rk = R // f
    Rp = _round_up(Rk, 8)
    if Rp >= 2 * _TR:
        tr = _TR
    elif Rp >= 16 and Rp % 16 == 0:
        tr = Rp // 2                              # >= 2 blocks for v7x megacore
    else:
        tr = Rp
    Rp = _round_up(Rp, tr)
    xp = jnp.pad(xk, ((0, Rp - Rk), (0, 0))) if Rp != Rk else xk
    y = _affine_padded(xp, sk, bk, relu=relu, tr=tr, out_dtype=out_dtype)
    if Rp != Rk:
        y = y[:Rk]
    return y.reshape(N, H, W, C)


# ----------------------------------------------------------------------------
# NN building blocks (im2col / reshapes / resize are glue; matmuls & BN-affine in Pallas)
# ----------------------------------------------------------------------------
def conv2d(x, p, stride=1, padding=(0, 0), want_stats=False):
    """x: NHWC. p['w']: (O, I, KH, KW) (PyTorch layout). p['b']: (O,) or None.
    Bias and (optionally) BN statistics are fused into the matmul epilogue."""
    w = p["w"]
    O, I, KH, KW = w.shape
    N, H, W_, C = x.shape
    bias = p.get("b")
    if KH == 1 and KW == 1 and stride == 1 and padding == (0, 0):
        res = matmul_bias(x.reshape(N * H * W_, C), w.reshape(O, C).T, bias,
                          want_stats=want_stats)
        if want_stats:
            y, stats = res
            return y.reshape(N, H, W_, O), stats
        return res.reshape(N, H, W_, O)
    ph, pw = padding
    # TODO(synk): fuse the KHxKW tap gather into the matmul K axis (shifted VMEM reads)
    # instead of materialising the bf16 im2col tensor.
    xp = jnp.pad(x.astype(jnp.bfloat16), ((0, 0), (ph, ph), (pw, pw), (0, 0)))
    Ho = (H + 2 * ph - KH) // stride + 1
    Wo = (W_ + 2 * pw - KW) // stride + 1
    cols = []
    for kh in range(KH):
        for kw in range(KW):
            cols.append(xp[:, kh:kh + (Ho - 1) * stride + 1:stride,
                           kw:kw + (Wo - 1) * stride + 1:stride, :])
    patches = jnp.stack(cols, axis=3)                         # (N, Ho, Wo, KH*KW, C)
    a = patches.reshape(N * Ho * Wo, KH * KW * C)
    wm = jnp.transpose(w, (2, 3, 1, 0)).reshape(KH * KW * I, O)
    res = matmul_bias(a, wm, bias, want_stats=want_stats)
    if want_stats:
        y, stats = res
        return y.reshape(N, Ho, Wo, O), stats
    return res.reshape(N, Ho, Wo, O)


def grouped_conv2d(x, w, groups, stride=1, padding=(1, 1), want_stats=False):
    """PyTorch grouped Conv2d lowered to a block-diagonal-per-128-lanes Pallas matmul:
    lane-dense output tiles, per-group weight HBM traffic, no group-major transpose of
    the patch tensor (taps stacked last => flattened K is already group-major)."""
    O, Cg, KH, KW = w.shape
    G = groups
    Og = O // G
    N, H, W_, C = x.shape
    ph, pw = padding
    xp = jnp.pad(x.astype(jnp.bfloat16), ((0, 0), (ph, ph), (pw, pw), (0, 0)))
    Ho = (H + 2 * ph - KH) // stride + 1
    Wo = (W_ + 2 * pw - KW) // stride + 1
    P = KH * KW
    Kg = P * Cg
    cols = []
    for kh in range(KH):
        for kw in range(KW):
            cols.append(xp[:, kh:kh + (Ho - 1) * stride + 1:stride,
                           kw:kw + (Wo - 1) * stride + 1:stride, :])
    patches = jnp.stack(cols, axis=-1)                        # (N, Ho, Wo, C, P)
    M = N * Ho * Wo
    a = patches.reshape(M, C * P)                             # K order: (g, cg, tap)
    # per-group weights with matching (cg, tap) K order
    wg = jnp.transpose(w.reshape(G, Og, Cg, KH, KW), (0, 2, 3, 4, 1)).reshape(G, Kg, Og)

    bg = 128 // Og if (Og <= 128 and 128 % Og == 0) else 0
    ok = (bg > 0 and G % bg == 0 and (bg * Kg) % 128 == 0
          and M >= 64 and M % 8 == 0)
    if not ok:
        y = jnp.einsum("mgk,gkn->mgn", a.reshape(M, G, Kg),
                       wg.astype(jnp.bfloat16),
                       preferred_element_type=jnp.float32).reshape(M, O)
        y = y.reshape(N, Ho, Wo, O)
        return (y, None) if want_stats else y

    nj = G // bg
    kb = bg * Kg
    nb = bg * Og                                              # == 128
    # Block-diagonal weight slab per 128-lane group block (tiny: <= a few MB).
    eye = jnp.eye(bg, dtype=wg.dtype)
    wbd = jnp.einsum("jbko,bc->jbkco", wg.reshape(nj, bg, Kg, Og), eye)
    wbd = wbd.reshape(nj * kb, nb).astype(jnp.bfloat16)

    tm = M if M <= _TM_CAP else _TM_CAP
    Mp = _round_up(M, tm)
    if (Mp // tm) * nj < 2 and tm % 16 == 0:                  # v7x: >= 2 parallel blocks
        tm //= 2
    ap = jnp.pad(a, ((0, Mp - M), (0, 0))) if Mp != M else a
    y, stats = _grouped_bd_mm(ap, wbd, tm=tm, kb=kb, nb=nb)
    if Mp != M:
        y = y[:M]
        stats = None
    else:
        stats = stats.sum(axis=0)
    y = y.reshape(N, Ho, Wo, O)
    return (y, stats) if want_stats else y


def conv_transpose_2x2(x, p):
    """ConvTranspose2d(kernel=2, stride=2). p['w']: (Cin, Cout, 2, 2). Bias fused."""
    w = p["w"]
    Cin, Cout = w.shape[0], w.shape[1]
    N, H, W, _ = x.shape
    wm = w.reshape(Cin, Cout * 4)
    bias4 = jnp.repeat(p["b"], 4)                              # column order (cout, kh, kw)
    y = matmul_bias(x.reshape(N * H * W, Cin), wm, bias4)
    y = y.reshape(N, H, W, Cout, 2, 2)
    y = jnp.transpose(y, (0, 1, 4, 2, 5, 3)).reshape(N, 2 * H, 2 * W, Cout)
    return y


def batch_norm(x, p, relu=False, eps=1e-5, stats=None, out_dtype=jnp.float32):
    # Training-mode BatchNorm2d.  `stats` = (2, C) fused [sum, sum_sq] from the conv
    # epilogue when available; otherwise a single-pass E[x^2]-E[x]^2 in XLA.
    # NOTE: E[x^2]-E[x]^2 can cancel for |mean| >> std; clamped at 0 (same as before).
    N, H, W, C = x.shape
    cnt = N * H * W
    if stats is not None:
        s1, s2 = stats[0], stats[1]
    else:
        xf = x.astype(jnp.float32).reshape(-1, C)
        s1 = jnp.sum(xf, axis=0)
        s2 = jnp.sum(xf * xf, axis=0)
    mean = s1 / cnt
    var = jnp.maximum(s2 / cnt - mean * mean, 0.0)
    scale = p["g"] / jnp.sqrt(var + eps)
    shift = p["b"] - mean * scale
    return affine_act(x, scale, shift, relu=relu, out_dtype=out_dtype)


def conv_bn(x, cp, bnp, relu=False, stride=1, padding=(0, 0), out_dtype=jnp.float32):
    y, stats = conv2d(x, cp, stride=stride, padding=padding, want_stats=True)
    return batch_norm(y, bnp, relu=relu, stats=stats, out_dtype=out_dtype)


def maxpool2(x):
    N, H, W, C = x.shape
    return x.reshape(N, H // 2, 2, W // 2, 2, C).max(axis=(2, 4))


def bilinear_resize(x, out_h, out_w, align_corners):
    # glue: bilinear interpolation (UpsamplingBilinear2d -> align_corners=True,
    # torchvision Resize -> align_corners=False)
    N, H, W, C = x.shape

    def coords(out, inp):
        i = jnp.arange(out, dtype=jnp.float32)
        if align_corners:
            scale = (inp - 1) / (out - 1) if out > 1 else 0.0
            src = i * scale
        else:
            src = jnp.maximum((i + 0.5) * (inp / out) - 0.5, 0.0)
        i0 = jnp.clip(jnp.floor(src).astype(jnp.int32), 0, inp - 1)
        i1 = jnp.clip(i0 + 1, 0, inp - 1)
        frac = src - i0.astype(jnp.float32)
        return i0, i1, frac

    h0, h1, fh = coords(out_h, H)
    w0, w1, fw = coords(out_w, W)
    top = (x[:, h0] * (1.0 - fh)[None, :, None, None]
           + x[:, h1] * fh[None, :, None, None])
    out = (top[:, :, w0] * (1.0 - fw)[None, None, :, None]
           + top[:, :, w1] * fw[None, None, :, None])
    return out


def center_crop(x, th, tw):
    """torchvision-style CenterCrop (zero-pads when the target is larger)."""
    N, H, W, C = x.shape
    if th > H or tw > W:
        pt = max((th - H) // 2, 0)
        pb = max(th - H - pt, 0)
        pleft = max((tw - W) // 2, 0)
        pr = max(tw - W - pleft, 0)
        x = jnp.pad(x, ((0, 0), (pt, pb), (pleft, pr), (0, 0)))
        N, H, W, C = x.shape
    top = int(round((H - th) / 2.0))
    left = int(round((W - tw) / 2.0))
    return x[:, top:top + th, left:left + tw, :]


def se_module(x, p):
    # Tiny GEMMs (M = batch): plain XLA path on purpose.
    N, H, W, C = x.shape
    m = jnp.mean(x, axis=(1, 2))                              # (N, C)
    w1 = p["se1"]["w"].reshape(-1, C)                         # (Cmid, C)
    h = jnp.maximum(m @ w1.T + p["se1"]["b"], 0.0)
    w2 = p["se2"]["w"].reshape(C, -1)                         # (C, Cmid)
    s = jax.nn.sigmoid(h @ w2.T + p["se2"]["b"])
    return x * s[:, None, None, :]


def bottleneck(x, p):
    residual = x
    if p["ds"] is not None:
        r = x
        if p["ds"]["pool"]:
            r = maxpool2(r)
        residual = conv_bn(r, p["ds"]["c"], p["ds"]["bn"])
    # bn1/bn2 outputs feed only the next conv -> emit bf16 to halve activation traffic.
    h = conv_bn(x, p["c1"], p["bn1"], relu=True, out_dtype=jnp.bfloat16)
    h, gstats = grouped_conv2d(h, p["c2"]["w"], groups=p["c2"]["groups"],
                               stride=p["stride"], padding=(1, 1), want_stats=True)
    h = batch_norm(h, p["bn2"], relu=True, stats=gstats, out_dtype=jnp.bfloat16)
    h = conv_bn(h, p["c3"], p["bn3"])
    h = se_module(h, p)
    return jnp.maximum(h + residual, 0.0)


def asym_conv(x, p):
    xsq = conv_bn(x, p["sq"], p["sq_bn"], stride=1, padding=(1, 1))
    # hor_conv with pad=1 followed by [:, :, 1:-1] == pad only along width
    xh = conv_bn(x, p["hor"], p["hor_bn"], stride=1, padding=(0, 1))
    # NOTE: reference forward normalizes xv with hor_bn (bug preserved), ver_bn unused
    xv = conv_bn(x, p["ver"], p["hor_bn"], stride=1, padding=(1, 0))
    return xsq + xh + xv


def shuffle_attn(x, p, eps=1e-5):
    # 1x1 convs here have K = N <= 16: routed to XLA (not worth 128-padded MXU calls).
    N, H, W, C = x.shape
    gnum = 16
    gs = C // gnum
    ls = gs // 2
    xg = x.reshape(N, H, W, gnum, 2, ls)
    h0 = xg[..., 0, :]
    h1 = xg[..., 1, :]
    m = jnp.mean(h0, axis=(1, 2))                             # (N, gnum, ls)
    wt = p["top"]["w"].reshape(ls, ls)
    t = jax.nn.sigmoid(jnp.einsum("ngl,kl->ngk", m, wt) + p["top"]["b"])
    t = t[:, None, None, :, :]
    ng = ls // 2
    h1g = h1.reshape(N, H, W, gnum, ng, ls // ng)
    mean = jnp.mean(h1g, axis=(1, 2, 5), keepdims=True)
    var = jnp.mean((h1g - mean) ** 2, axis=(1, 2, 5), keepdims=True)
    h1n = ((h1g - mean) / jnp.sqrt(var + eps)).reshape(N, H, W, gnum, ls)
    h1n = h1n * p["gn_g"] + p["gn_b"]
    wb = p["bot"]["w"].reshape(ls, ls)
    b = jax.nn.sigmoid(jnp.einsum("nhwgl,kl->nhwgk", h1n, wb) + p["bot"]["b"])
    out = jnp.stack([h0 * t, h1 * b], axis=4)
    return out.reshape(N, H, W, C)


def esc_apply(x, p):
    N, H, W, C = x.shape
    y = bilinear_resize(x, H * p["scale"], W * p["scale"], align_corners=True)
    return conv2d(y, p["conv"], stride=1, padding=(0, 0))


def up_seq(x, p):
    h = conv_bn(x, p["conv"], p["bn"], relu=True, stride=1, padding=(1, 1),
                out_dtype=jnp.bfloat16)
    return asym_conv(h, p["asym"])


# ----------------------------------------------------------------------------
# Full forward pass
# ----------------------------------------------------------------------------
def improved_unet_forward(params, pre_nchw, post_nchw):
    pre = jnp.transpose(pre_nchw, (0, 2, 3, 1)).astype(jnp.float32)
    post = jnp.transpose(post_nchw, (0, 2, 3, 1)).astype(jnp.float32)

    def stem(x):
        return conv_bn(x, params["stem_conv"], params["stem_bn"], relu=True,
                       stride=2, padding=(3, 3))

    def run_layer(x, blocks):
        for bp in blocks:
            x = bottleneck(x, bp)
        return x

    skip_pre, skip_post = [], []
    pre = stem(pre); skip_pre.append(pre)
    post = stem(post); skip_post.append(post)
    for layer in params["downs"][:-1]:
        pre = run_layer(pre, layer); skip_pre.append(pre)
        post = run_layer(post, layer); skip_post.append(post)
    pre = run_layer(pre, params["downs"][-1])
    post = run_layer(post, params["downs"][-1])
    skip_pre = skip_pre[::-1]
    skip_post = skip_post[::-1]

    extra = []
    for i in range(4):
        pre = conv_transpose_2x2(pre, params["ups_pre_ct"][i])
        if pre.shape != skip_pre[i].shape:
            skip_pre[i] = center_crop(skip_pre[i], pre.shape[1], pre.shape[2])
        pre = jnp.concatenate([skip_pre[i], pre], axis=-1)

        post = conv_transpose_2x2(post, params["ups_post_ct"][i])
        if pre.shape != skip_pre[i].shape:        # same (buggy) condition as the reference
            skip_post[i] = center_crop(skip_post[i], post.shape[1], post.shape[2])
        post = jnp.concatenate([skip_pre[i], post], axis=-1)   # reference concatenates skip_pre

        pre = up_seq(pre, params["ups_pre_seq"][i])
        post = up_seq(post, params["ups_post_seq"][i])
        pre = post = shuffle_attn(pre + post, params["shuffles"][i])

        if i <= 1:
            extra.append([esc_apply(pre, params["esc"][0][i]),
                          esc_apply(post, params["esc"][1][i])])
        if i == 3:
            th, tw = pre.shape[1], pre.shape[2]
            rz = lambda t: bilinear_resize(t, th, tw, align_corners=False)
            pre = jnp.concatenate([rz(extra[0][0]), rz(extra[1][0]),
                                   rz(skip_pre[i]), pre], axis=-1)
            post = jnp.concatenate([rz(extra[0][1]), rz(extra[1][1]),
                                    rz(skip_post[i]), post], axis=-1)

    def final(x, fp):
        return conv_bn(x, fp["conv"], fp["bn"], relu=True)

    pre = final(pre, params["final"][0])
    post = final(post, params["final"][1])
    comb = jnp.concatenate([pre, post], axis=-1)
    out = conv2d(comb, params["to_output"], stride=1, padding=(0, 0))
    return jnp.transpose(out, (0, 3, 1, 2))


# ----------------------------------------------------------------------------
# Deterministic parameter construction (synthetic init, PyTorch layouts)
# ----------------------------------------------------------------------------
_KEY = jax.random.PRNGKey(0)
_COUNTER = [0]


def _next(shape, scale):
    _COUNTER[0] += 1
    k = jax.random.fold_in(_KEY, _COUNTER[0])
    return jax.random.normal(k, shape, dtype=jnp.float32) * scale


def make_conv(cin, cout, kh, kw, bias):
    w = _next((cout, cin, kh, kw), 1.0 / math.sqrt(cin * kh * kw))
    return {"w": w, "b": jnp.zeros((cout,), jnp.float32) if bias else None}


def make_bn(c):
    return {"g": jnp.ones((c,), jnp.float32), "b": jnp.zeros((c,), jnp.float32)}


def make_convT(cin, cout):
    return {"w": _next((cin, cout, 2, 2), 1.0 / math.sqrt(cin * 4)),
            "b": jnp.zeros((cout,), jnp.float32)}


def make_bottleneck(cin, mid, stride, ds_kind):
    cardinality, base = 32, 4
    agg = int(math.floor(mid * base / 64) * cardinality)
    out = mid * 2
    wg = _next((agg, agg // cardinality, 3, 3),
               1.0 / math.sqrt((agg // cardinality) * 9))
    p = {
        "c1": make_conv(cin, agg, 1, 1, False), "bn1": make_bn(agg),
        "c2": {"w": wg, "groups": cardinality}, "bn2": make_bn(agg),
        "c3": make_conv(agg, out, 1, 1, False), "bn3": make_bn(out),
        "se1": make_conv(out, out // 16, 1, 1, True),
        "se2": make_conv(out // 16, out, 1, 1, True),
        "stride": stride, "ds": None,
    }
    if ds_kind is not None:
        p["ds"] = {"pool": ds_kind == "pool_conv",
                   "c": make_conv(cin, out, 1, 1, False),
                   "bn": make_bn(out)}
    return p


def make_asym(c):
    return {"sq": make_conv(c, c, 3, 3, True),
            "hor": make_conv(c, c, 1, 3, True),
            "ver": make_conv(c, c, 3, 1, True),
            "sq_bn": make_bn(c), "hor_bn": make_bn(c), "ver_bn": make_bn(c)}


def make_shuffle(c, group_num=16):
    ls = (c // group_num) // 2
    return {"gn_g": jnp.ones((ls,), jnp.float32),
            "gn_b": jnp.zeros((ls,), jnp.float32),
            "top": make_conv(ls, ls, 1, 1, True),
            "bot": make_conv(ls, ls, 1, 1, True)}


def build_params(in_channels=3, out_channels=1):
    features = (64, 128, 256, 512)
    layers = (3, 4, 6, 3)
    p = {"stem_conv": make_conv(in_channels, features[0], 7, 7, False),
         "stem_bn": make_bn(features[0])}
    cin = features[0]
    downs = []
    for i, f in enumerate(features):
        stride = 1 if i == 0 else 2
        blocks = []
        for j in range(layers[i]):
            if j == 0:
                ds = "conv" if stride == 1 else "pool_conv"
                blocks.append(make_bottleneck(cin, f, stride, ds))
            else:
                blocks.append(make_bottleneck(cin, f, 1, None))
            cin = f * 2
        downs.append(blocks)
    p["downs"] = downs

    sf = [4, 2]
    p["ups_pre_ct"], p["ups_post_ct"] = [], []
    p["ups_pre_seq"], p["ups_post_seq"] = [], []
    p["shuffles"] = []
    p["esc"] = [[], []]
    for i in range(len(features)):
        f = features[len(features) - i - 1]
        inf = f * 2
        p["ups_pre_ct"].append(make_convT(inf, f))
        p["ups_pre_seq"].append({"conv": make_conv(inf, f, 3, 3, False),
                                 "bn": make_bn(f), "asym": make_asym(f)})
        p["ups_post_ct"].append(make_convT(inf, f))
        p["ups_post_seq"].append({"conv": make_conv(inf, f, 3, 3, False),
                                  "bn": make_bn(f), "asym": make_asym(f)})
        p["shuffles"].append(make_shuffle(f))
        if i == 1:
            for t in (0, 1):
                p["esc"][t].append({"scale": sf[1],
                                    "conv": make_conv(f, 64, 3, 3, False)})
        if i == 0:
            for t in (0, 1):
                p["esc"][t].append({"scale": sf[0],
                                    "conv": make_conv(f, 64, 1, 1, False)})
    p["final"] = [{"conv": make_conv(4 * features[0], features[0], 1, 1, True),
                   "bn": make_bn(features[0])} for _ in range(2)]
    p["to_output"] = make_conv(2 * features[0], out_channels, 1, 1, True)
    return p


if __name__ == "__main__":
    params = build_params(in_channels=3, out_channels=1)
    # Whole-model jit: params captured as a closure so config ints stay static.
    forward_fn = jax.jit(functools.partial(improved_unet_forward, params))
    key = jax.random.PRNGKey(0)
    k1, k2 = jax.random.split(key)
    pre = jax.random.normal(k1, (2, 3, 32, 32), dtype=jnp.float32)    # NCHW, like PyTorch
    post = jax.random.normal(k2, (2, 3, 32, 32), dtype=jnp.float32)
    out = jax.block_until_ready(forward_fn(pre, post))
    assert out.shape == (2, 1, 32, 32), out.shape
    assert bool(jnp.all(jnp.isfinite(out)))
    print("KERNEL_OK")
</pallas_src>

<mosaic_0001>
module attributes {stable_mosaic.version = 11 : i64} {
  func.func @_matmul_kernel(%arg0: i32, %arg1: i32, %arg2: i32, %arg3: memref<256x147xbf16, #tpu.memory_space<vmem>>, %arg4: memref<147x64xbf16, #tpu.memory_space<vmem>>, %arg5: memref<1x64xf32, #tpu.memory_space<vmem>>, %arg6: memref<256x64xf32, #tpu.memory_space<vmem>>, %arg7: memref<1x2x64xf32, #tpu.memory_space<vmem>>) attributes {dimension_semantics = [#tpu.dimension_semantics<parallel>, #tpu.dimension_semantics<parallel>, #tpu.dimension_semantics<arbitrary>], iteration_bounds = array<i64: 2, 1, 1>, scalar_prefetch = 0 : i64, scratch_operands = 0 : i64, tpu.core_type = #tpu.core_type<tc>, window_params = [{transform_indices = @transform_0, window_bounds = array<i64: 256, 147>}, {transform_indices = @transform_1, window_bounds = array<i64: 147, 64>}, {transform_indices = @transform_2, window_bounds = array<i64: 1, 64>}, {transform_indices = @transform_3, window_bounds = array<i64: 256, 64>}, {transform_indices = @transform_4, window_bounds = array<i64: 1, 2, 64>}]} {
    %c0 = arith.constant 0 : index
    %c0_0 = arith.constant 0 : index
    %0 = vector.load %arg3[%c0, %c0_0] : memref<256x147xbf16, #tpu.memory_space<vmem>>, vector<256x147xbf16>
    %c0_1 = arith.constant 0 : index
    %c0_2 = arith.constant 0 : index
    %1 = vector.load %arg4[%c0_1, %c0_2] : memref<147x64xbf16, #tpu.memory_space<vmem>>, vector<147x64xbf16>
    %cst = arith.constant dense<0.000000e+00> : vector<256x64xf32>
    %2 = tpu.matmul %0, %1, %cst {dimension_numbers = #tpu.dot_dimension_numbers<[1], [0], [0], [1], [0, 0, 1, 1], [], []>} : vector<256x147xbf16>, vector<147x64xbf16>, vector<256x64xf32> -> vector<256x64xf32>
    %c0_i32 = arith.constant 0 : i32
    %3 = arith.cmpi eq, %arg2, %c0_i32 : i32
    %4 = arith.extui %3 : i1 to i32
    %c0_i32_3 = arith.constant 0 : i32
    %5 = arith.cmpi ne, %4, %c0_i32_3 : i32
    scf.if %5 {
      %c0_8 = arith.constant 0 : index
      %c0_9 = arith.constant 0 : index
      %12 = vector.load %arg5[%c0_8, %c0_9] : memref<1x64xf32, #tpu.memory_space<vmem>>, vector<1x64xf32>
      %13 = vector.broadcast %12 : vector<1x64xf32> to vector<256x64xf32>
      %14 = arith.addf %2, %13 : vector<256x64xf32>
      %c0_10 = arith.constant 0 : index
      %c0_11 = arith.constant 0 : index
      %15 = vector.load %arg6[%c0_10, %c0_11] : memref<256x64xf32, #tpu.memory_space<vmem>>, vector<256x64xf32>
      tpu.vector_store %arg6[%c0_10, %c0_11], %14 {strides = array<i32>} : memref<256x64xf32, #tpu.memory_space<vmem>>, vector<256x64xf32>,
    } else {
    }
    %c0_i32_4 = arith.constant 0 : i32
    %6 = arith.cmpi ne, %arg2, %c0_i32_4 : i32
    %7 = arith.extui %6 : i1 to i32
    %c0_i32_5 = arith.constant 0 : i32
    %8 = arith.cmpi ne, %7, %c0_i32_5 : i32
    scf.if %8 {
      %c0_8 = arith.constant 0 : index
      %c0_9 = arith.constant 0 : index
      %12 = vector.load %arg6[%c0_8, %c0_9] : memref<256x64xf32, #tpu.memory_space<vmem>>, vector<256x64xf32>
      %13 = arith.addf %12, %2 : vector<256x64xf32>
      %c0_10 = arith.constant 0 : index
      %c0_11 = arith.constant 0 : index
      %14 = vector.load %arg6[%c0_10, %c0_11] : memref<256x64xf32, #tpu.memory_space<vmem>>, vector<256x64xf32>
      tpu.vector_store %arg6[%c0_10, %c0_11], %13 {strides = array<i32>} : memref<256x64xf32, #tpu.memory_space<vmem>>, vector<256x64xf32>,
    } else {
    }
    %c0_i32_6 = arith.constant 0 : i32
    %9 = arith.cmpi eq, %arg2, %c0_i32_6 : i32
    %10 = arith.extui %9 : i1 to i32
    %c0_i32_7 = arith.constant 0 : i32
    %11 = arith.cmpi ne, %10, %c0_i32_7 : i32
    scf.if %11 {
      %c0_8 = arith.constant 0 : index
      %c0_9 = arith.constant 0 : index
      %12 = vector.load %arg6[%c0_8, %c0_9] : memref<256x64xf32, #tpu.memory_space<vmem>>, vector<256x64xf32>
      %cst_10 = arith.constant dense<0.000000e+00> : vector<64xf32>
      %13 = vector.multi_reduction <add>, %12, %cst_10 [0] : vector<256x64xf32> to vector<64xf32>
      %14 = vector.shape_cast %13 : vector<64xf32> to vector<1x64xf32>
      %15 = arith.mulf %12, %12 : vector<256x64xf32>
      %cst_11 = arith.constant dense<0.000000e+00> : vector<64xf32>
      %16 = vector.multi_reduction <add>, %15, %cst_11 [0] : vector<256x64xf32> to vector<64xf32>
      %17 = vector.shape_cast %16 : vector<64xf32> to vector<1x64xf32>
      %18 = tpu.concatenate %14, %17 in 0 : vector<1x64xf32>, vector<1x64xf32> -> vector<2x64xf32>
      %c0_12 = arith.constant 0 : index
      %c0_13 = arith.constant 0 : index
      %c0_14 = arith.constant 0 : index
      %19 = vector.load %arg7[%c0_12, %c0_13, %c0_14] : memref<1x2x64xf32, #tpu.memory_space<vmem>>, vector<1x2x64xf32>
      %20 = vector.shape_cast %19 : vector<1x2x64xf32> to vector<2x64xf32>
      %21 = vector.shape_cast %18 : vector<2x64xf32> to vector<1x2x64xf32>
      tpu.vector_store %arg7[%c0_12, %c0_13, %c0_14], %21 {strides = array<i32>} : memref<1x2x64xf32, #tpu.memory_space<vmem>>, vector<1x2x64xf32>,
    } else {
    }
    return
  }
  func.func @transform_0(%arg0: i32, %arg1: i32, %arg2: i32) -> (i32, i32) {
    %c0_i32 = arith.constant 0 : i32
    return %arg0, %arg2 : i32, i32
  }
  func.func @transform_1(%arg0: i32, %arg1: i32, %arg2: i32) -> (i32, i32) {
    %c0_i32 = arith.constant 0 : i32
    return %arg2, %arg1 : i32, i32
  }
  func.func @transform_2(%arg0: i32, %arg1: i32, %arg2: i32) -> (i32, i32) {
    %c0_i32 = arith.constant 0 : i32
    %c0_i32_0 = arith.constant 0 : i32
    return %c0_i32, %arg1 : i32, i32
  }
  func.func @transform_3(%arg0: i32, %arg1: i32, %arg2: i32) -> (i32, i32) {
    %c0_i32 = arith.constant 0 : i32
    return %arg0, %arg1 : i32, i32
  }
  func.func @transform_4(%arg0: i32, %arg1: i32, %arg2: i32) -> (i32, i32, i32) {
    %c0_i32 = arith.constant 0 : i32
    %c0_i32_0 = arith.constant 0 : i32
    return %arg0, %c0_i32, %arg1 : i32, i32, i32
  }
}

</mosaic_0001>

<llo_original>
// kernel: _matmul_padded.1
$region0: #{_matmul_padded.1}
  #allocation0 [shape = 'u32[]', space=smem, size = 0x4, offset = 0x4, fixed_abs, tag = 'smem constant byte address 0x4 - core index']
  #allocation1 [shape = 'u32[144,128]{1,0:T(1,128)}', space=vmem, size = 0x12000, scoped, tag = 'internal scratch']
  %s0 = inlined_call_operand.vmem [shape: bf16[512,147], index: 0, kind: input, shape index: {}]
  %s1 = inlined_call_operand.vmem [shape: bf16[147,64], index: 1, kind: input, shape index: {}]
  %s2 = inlined_call_operand.vmem [shape: f32[1,64], index: 2, kind: input, shape index: {}]
  %s3 = inlined_call_operand.vmem [shape: f32[512,64], index: 3, kind: output, shape index: {0}]
  %s4 = inlined_call_operand.hbm [shape: f32[2,2,64], index: 4, kind: output, shape index: {1}]
  %5 = xla_tuple %s3, %s4
  %s6 = sld [smem:[#allocation0]]
  $region65: #{_matmul_padded.1} parent=0
    _
  %s8 = ssub.s32 1, %s6
  %s9 = scalar_select 0, %s8, %s6
  $region1: #{_matmul_padded.1} parent=0
    #allocation2 [shape = 'u8[2048]{0}', space=vmem, size = 0x800, scoped, tag = 'output window, operand 1']
    #allocation3 [shape = 's32[2]{0}', space=sflag, size = 0x8, scoped, tag = 'scoped memory for _matmul_padded.1']
    %10 = vsyncpa [#allocation3], 0
    %s11 = scalar_lea.sflag [#allocation3], 1
    %12 = vsyncpa %s11, 0
    loop: start=0, step=1, limit=4
    $region2: #{_matmul_padded.1} parent=1 // loop_pre_header
      _
    $region3: #{_matmul_padded.1} parent=1 // loop_header
      %s14 = sphi 0, %s18
      %p15 = scmp.ge.s32.totalorder %s14, 4
      %s21 = sphi 0, %s40
      %s22 = sphi 0, %s36
      %s23 = sphi 0, %s32
      %s24 = sphi 0, %s21
      %s25 = sphi 0, %s22
      %s26 = sphi 0, %s23
      %s27 = sphi 0, %s24
      %s28 = sphi 0, %s25
      %s29 = sphi 0, %s26
      %s45 = sphi 0, %s47
      %s48 = sphi 0, %s45
      %s49 = sphi 0, %s48
      %s65 = sphi 0, %s49
      %s73 = sphi 0, %s75
      %s76 = sphi 0, %s73
      %s77 = sphi 0, %s76
      %s93 = sphi 0, %s77
      %s99 = sphi 0, %s101
      %s102 = sphi 0, %s99
      %s103 = sphi 0, %s102
      %s119 = sphi 0, %s103
      %s127 = sphi 0, %s129
      %s130 = sphi 0, %s127
      %s131 = sphi 0, %s130
      %s147 = sphi 0, %s131
      %s155 = sphi 0, %s157
      %s158 = sphi 0, %s155
      %s159 = sphi 0, %s158
      %s175 = sphi 0, %s159
    $region4: #{_matmul_padded.1} parent=1 // loop_header_branch
      %17 = sbr.rel (%p15) target = $region8
    $region5: #{_matmul_padded.1} parent=1 // loop_body
      %s19 = ssub.s32 %s14, 1
      %s20 = ssub.s32 %s14, 2
      %s30 = sadd.s32 1, %s23
      %p31 = scmp.ge.s32.totalorder %s30, 1
      %s32 = scalar_select %p31, 0, %s30
      %s33 = sadd.s32 1, %s22
      %s34 = scalar_select %p31, %s33, %s22
      %p35 = scmp.ge.s32.totalorder %s34, 1
      %s36 = scalar_select %p35, 0, %s34
      %s37 = sadd.s32 1, %s21
      %s38 = scalar_select %p35, %s37, %s21
      %p39 = scmp.ge.s32.totalorder %s38, 2
      %s40 = scalar_select %p39, 0, %s38
      %s41 = ssub.s32 %s21, %s40
      %s42 = ssub.s32 %s23, %s32
      %s43 = sor.u32 %s41, %s42
      %p44 = scmp.eq.s32.totalorder %s43, 0
      %s46 = sadd.s32 %s45, 1
      %s47 = scalar_select %p44, %s45, %s46
      %p50 = pneg %p44
      %p51 = scmp.eq.s32.totalorder %s14, 1
      %p52 = por %p50, %p51
      %p53 = scmp.ne.s32.totalorder %s45, %s48
      %p54 = scmp.eq.s32.totalorder %s14, 0
      %p55 = por %p53, %p54
      %p56 = scmp.ne.s32.totalorder %s45, %s48
      %p57 = scmp.eq.s32.totalorder %s19, 1
      %p58 = por %p56, %p57
      %p59 = scmp.ne.s32.totalorder %s48, %s49
      %p60 = scmp.eq.s32.totalorder %s19, 0
      %p61 = por %p59, %p60
      %p62 = scmp.ne.s32.totalorder %s48, %s49
      %p63 = scmp.eq.s32.totalorder %s20, 1
      %p64 = por %p62, %p63
      %p66 = scmp.ne.s32.totalorder %s49, %s65
      %p67 = scmp.eq.s32.totalorder %s20, 0
      %p68 = por %p66, %p67
      %s69 = ssub.s32 %s23, %s32
      %s70 = ssub.s32 %s22, %s36
      %s71 = sor.u32 %s69, %s70
      %p72 = scmp.eq.s32.totalorder %s71, 0
      %s74 = sadd.s32 %s73, 1
      %s75 = scalar_select %p72, %s73, %s74
      %p78 = pneg %p72
      %p79 = scmp.eq.s32.totalorder %s14, 1
      %p80 = por %p78, %p79
      %p81 = scmp.ne.s32.totalorder %s73, %s76
      %p82 = scmp.eq.s32.totalorder %s14, 0
      %p83 = por %p81, %p82
      %p84 = scmp.ne.s32.totalorder %s73, %s76
      %p85 = scmp.eq.s32.totalorder %s19, 1
      %p86 = por %p84, %p85
      %p87 = scmp.ne.s32.totalorder %s76, %s77
      %p88 = scmp.eq.s32.totalorder %s19, 0
      %p89 = por %p87, %p88
      %p90 = scmp.ne.s32.totalorder %s76, %s77
      %p91 = scmp.eq.s32.totalorder %s20, 1
      %p92 = por %p90, %p91
      %p94 = scmp.ne.s32.totalorder %s77, %s93
      %p95 = scmp.eq.s32.totalorder %s20, 0
      %p96 = por %p94, %p95
      %s97 = ssub.s32 %s22, %s36
      %p98 = scmp.eq.s32.totalorder %s97, 0
      %s100 = sadd.s32 %s99, 1
      %s101 = scalar_select %p98, %s99, %s100
      %p104 = pneg %p98
      %p105 = scmp.eq.s32.totalorder %s14, 1
      %p106 = por %p104, %p105
      %p107 = scmp.ne.s32.totalorder %s99, %s102
      %p108 = scmp.eq.s32.totalorder %s14, 0
      %p109 = por %p107, %p108
      %p110 = scmp.ne.s32.totalorder %s99, %s102
      %p111 = scmp.eq.s32.totalorder %s19, 1
      %p112 = por %p110, %p111
      %p113 = scmp.ne.s32.totalorder %s102, %s103
      %p114 = scmp.eq.s32.totalorder %s19, 0
      %p115 = por %p113, %p114
      %p116 = scmp.ne.s32.totalorder %s102, %s103
      %p117 = scmp.eq.s32.totalorder %s20, 1
      %p118 = por %p116, %p117
      %p120 = scmp.ne.s32.totalorder %s103, %s119
      %p121 = scmp.eq.s32.totalorder %s20, 0
      %p122 = por %p120, %p121
      %s123 = ssub.s32 %s21, %s40
      %s124 = ssub.s32 %s22, %s36
      %s125 = sor.u32 %s123, %s124
      %p126 = scmp.eq.s32.totalorder %s125, 0
      %s128 = sadd.s32 %s127, 1
      %s129 = scalar_select %p126, %s127, %s128
      %p132 = pneg %p126
      %p133 = scmp.eq.s32.totalorder %s14, 1
      %p134 = por %p132, %p133
      %p135 = scmp.ne.s32.totalorder %s127, %s130
      %p136 = scmp.eq.s32.totalorder %s14, 0
      %p137 = por %p135, %p136
      %p138 = scmp.ne.s32.totalorder %s127, %s130
      %p139 = scmp.eq.s32.totalorder %s19, 1
      %p140 = por %p138, %p139
      %p141 = scmp.ne.s32.totalorder %s130, %s131
      %p142 = scmp.eq.s32.totalorder %s19, 0
      %p143 = por %p141, %p142
      %p144 = scmp.ne.s32.totalorder %s130, %s131
      %p145 = scmp.eq.s32.totalorder %s20, 1
      %p146 = por %p144, %p145
      %p148 = scmp.ne.s32.totalorder %s131, %s147
      %p149 = scmp.eq.s32.totalorder %s20, 0
      %p150 = por %p148, %p149
      %s151 = ssub.s32 %s21, %s40
      %s152 = ssub.s32 %s22, %s36
      %s153 = sor.u32 %s151, %s152
      %p154 = scmp.eq.s32.totalorder %s153, 0
      %s156 = sadd.s32 %s155, 1
      %s157 = scalar_select %p154, %s155, %s156
      %p160 = pneg %p154
      %p161 = scmp.eq.s32.totalorder %s14, 1
      %p162 = por %p160, %p161
      %p163 = scmp.ne.s32.totalorder %s155, %s158
      %p164 = scmp.eq.s32.totalorder %s14, 0
      %p165 = por %p163, %p164
      %p166 = scmp.ne.s32.totalorder %s155, %s158
      %p167 = scmp.eq.s32.totalorder %s19, 1
      %p168 = por %p166, %p167
      %p169 = scmp.ne.s32.totalorder %s158, %s159
      %p170 = scmp.eq.s32.totalorder %s19, 0
      %p171 = por %p169, %p170
      %p172 = scmp.ne.s32.totalorder %s158, %s159
      %p173 = scmp.eq.s32.totalorder %s20, 1
      %p174 = por %p172, %p173
      %p176 = scmp.ne.s32.totalorder %s159, %s175
      %p177 = scmp.eq.s32.totalorder %s20, 0
      %p178 = por %p176, %p177
      %p179 = scmp.le.s32.totalorder 1, %s14
      %p180 = scmp.lt.s32.totalorder %s14, 3
      %p181 = pnand %p179, %p180
      %p182 = pneg %p181
      // Predicated region
      $region9: #{_matmul_padded.1} parent=5 // pred_check
        _
      $region10: #{_matmul_padded.1} parent=5 // pred_check_branch
        %184 = sbr.rel (%p181) target = $region12
      $region11: #{_matmul_padded.1} parent=5 // pred_region
        %s185 = ssub.s32 %s14, 1
        // Predicated region
        $region13: #{_matmul_padded.1} parent=11 // pred_check
          %p186 = pneg %p89
        $region14: #{_matmul_padded.1} parent=11 // pred_check_branch
          %188 = sbr.rel (%p186) target = $region16
        $region15: #{_matmul_padded.1} parent=11 // pred_region
          %s189 = smul.u32 19, %s26
          %p190 = scmp.lt.s32.totalorder %s189, 18
          %s191 = scalar_select %p190, %s189, 18
          %p192 = scmp.lt.s32.totalorder %s25, 0
          %s193 = scalar_select %p192, %s25, 0
          %s194 = sadd.s32 %s193, %s191
          %s195 = smul.addr %s194, 4
          %s196 = scalar_lea.vmem %s1, %s195
          %s197 = smul.u32 19, %s26
        $region16: #{_matmul_padded.1} parent=11 // pred_fallthru
          _
        // Predicated region
        $region17: #{_matmul_padded.1} parent=11 // pred_check
          %p198 = pneg %p115
        $region18: #{_matmul_padded.1} parent=11 // pred_check_branch
          %200 = sbr.rel (%p198) target = $region20
        $region19: #{_matmul_padded.1} parent=11 // pred_region
          %p201 = scmp.lt.s32.totalorder %s25, 0
          %s202 = scalar_select %p201, %s25, 0
          %s203 = scalar_lea.vmem %s2, %s202
        $region20: #{_matmul_padded.1} parent=11 // pred_fallthru
          _
      $region12: #{_matmul_padded.1} parent=5 // pred_fallthru
        _
      %p204 = scmp.lt.s32.totalorder %s14, 2
      // Predicated region
      $region21: #{_matmul_padded.1} parent=5 // pred_check
        %p205 = pneg %p204
      $region22: #{_matmul_padded.1} parent=5 // pred_check_branch
        %207 = sbr.rel (%p205) target = $region24
      $region23: #{_matmul_padded.1} parent=5 // pred_region
        // Predicated region
        $region25: #{_matmul_padded.1} parent=23 // pred_check
          %p208 = pneg %p55
        $region26: #{_matmul_padded.1} parent=23 // pred_check_branch
          %210 = sbr.rel (%p208) target = $region28
        $region27: #{_matmul_padded.1} parent=23 // pred_region
          %s211 = smul.u32 32, %s21
          %s212 = smul.u32 2, %s23
          %p213 = scmp.lt.s32.totalorder %s211, 63
          %s214 = scalar_select %p213, %s211, 63
          %p215 = scmp.lt.s32.totalorder %s212, 1
          %s216 = scalar_select %p215, %s212, 1
          %s217 = smul.addr %s214, 2
          %s218 = sadd.s32 %s216, %s217
          %s219 = smul.addr %s218, 4
          %s220 = scalar_lea.vmem %s0, %s219
          %s221 = smul.u32 32, %s21
          %s222 = smul.u32 2, %s23
        $region28: #{_matmul_padded.1} parent=23 // pred_fallthru
          _
      $region24: #{_matmul_padded.1} parent=5 // pred_fallthru
        _
      %p223 = scmp.le.s32.totalorder 1, %s14
      %p224 = scmp.lt.s32.totalorder %s14, 3
      %p225 = pnand %p223, %p224
      %p226 = pneg %p225
      // Predicated region
      $region29: #{_matmul_padded.1} parent=5 // pred_check
        _
      $region30: #{_matmul_padded.1} parent=5 // pred_check_branch
        %228 = sbr.rel (%p225) target = $region32
      $region31: #{_matmul_padded.1} parent=5 // pred_region
        %s229 = ssub.s32 %s14, 1
        %s230 = smul.u32 32, %s24
        %s231 = smul.u32 2, %s26
        %p232 = scmp.lt.s32.totalorder %s230, 63
        %s233 = scalar_select %p232, %s230, 63
        %p234 = scmp.lt.s32.totalorder %s231, 1
        %s235 = scalar_select %p234, %s231, 1
        %s236 = smul.addr %s233, 2
        %s237 = sadd.s32 %s235, %s236
        %s238 = smul.addr %s237, 4
        %s239 = scalar_lea.vmem %s0, %s238
        %p240 = pneg %p61
        %p241 = pneg %p58
        %s242 = smul.u32 19, %s26
        %p243 = scmp.lt.s32.totalorder %s242, 18
        %s244 = scalar_select %p243, %s242, 18
        %p245 = scmp.lt.s32.totalorder %s25, 0
        %s246 = scalar_select %p245, %s25, 0
        %s247 = sadd.s32 %s246, %s244
        %s248 = smul.addr %s247, 4
        %s249 = scalar_lea.vmem %s1, %s248
        %p250 = pneg %p89
        %p251 = pneg %p86
        %p252 = scmp.lt.s32.totalorder %s25, 0
        %s253 = scalar_select %p252, %s25, 0
        %s254 = scalar_lea.vmem %s2, %s253
        %p255 = pneg %p115
        %p256 = pneg %p112
        %p257 = pneg %p143
        %p258 = pneg %p140
        %s259 = smul.u32 32, %s24
        %p260 = scmp.lt.s32.totalorder %s259, 63
        %s261 = scalar_select %p260, %s259, 63
        %p262 = scmp.lt.s32.totalorder %s25, 0
        %s263 = scalar_select %p262, %s25, 0
        %s264 = sadd.s32 %s263, %s261
        %s265 = smul.addr %s264, 8
        %s266 = scalar_lea.vmem %s3, %s265
        %p267 = pneg %p171
        %p268 = pneg %p168
        %s269 = sand.u32 %s158, 1
        %s270 = scalar_lea.sflag [#allocation3], %s269
        %s271 = sand.u32 %s158, 1
        %s272 = smul.addr %s271, 2
        %s273 = scalar_lea.vmem [#allocation2], %s272
        %s274 = smul.u32 32, %s24
        %s275 = smul.u32 2, %s26
        %p276 = scmp.lt.s32.totalorder %s274, 63
        %s277 = scalar_select %p276, %s274, 63
        %p278 = scmp.lt.s32.totalorder %s275, 1
        %s279 = scalar_select %p278, %s275, 1
        %s280 = smul.addr %s277, 2
        %s281 = sadd.s32 %s279, %s280
        %s282 = smul.addr %s281, 4
        %s283 = scalar_lea.vmem %s0, %s282
        %s284 = smul.u32 32, %s24
        %s285 = smul.u32 2, %s26
        %s286 = smul.u32 19, %s26
        %p287 = scmp.lt.s32.totalorder %s286, 18
        %s288 = scalar_select %p287, %s286, 18
        %p289 = scmp.lt.s32.totalorder %s25, 0
        %s290 = scalar_select %p289, %s25, 0
        %s291 = sadd.s32 %s290, %s288
        %s292 = smul.addr %s291, 4
        %s293 = scalar_lea.vmem %s1, %s292
        %s294 = smul.u32 19, %s26
        %p295 = scmp.lt.s32.totalorder %s25, 0
        %s296 = scalar_select %p295, %s25, 0
        %s297 = scalar_lea.vmem %s2, %s296
        %s298 = smul.u32 32, %s24
        %p299 = scmp.lt.s32.totalorder %s298, 63
        %s300 = scalar_select %p299, %s298, 63
        %p301 = scmp.lt.s32.totalorder %s25, 0
        %s302 = scalar_select %p301, %s25, 0
        %s303 = sadd.s32 %s302, %s300
        %s304 = smul.addr %s303, 8
        %s305 = scalar_lea.vmem %s3, %s304
        %s306 = smul.u32 32, %s24
        %v308 = vld [vmem:[%s283] sm:$0xff]
        %v309 = vld [vmem:[%s283 + $0x8] sm:$0xff]
        %v310 = vld [vmem:[%s283 + $0x10] sm:$0xff]
        %v311 = vld [vmem:[%s283 + $0x18] sm:$0xff]
        %v312 = vld [vmem:[%s283 + $0x20] sm:$0xff]
        %v313 = vld [vmem:[%s283 + $0x28] sm:$0xff]
        %v314 = vld [vmem:[%s283 + $0x30] sm:$0xff]
        %v315 = vld [vmem:[%s283 + $0x38] sm:$0xff]
        %v316 = vld [vmem:[%s283 + $0x40] sm:$0xff]
        %v317 = vld [vmem:[%s283 + $0x48] sm:$0xff]
        %v318 = vld [vmem:[%s283 + $0x50] sm:$0xff]
        %v319 = vld [vmem:[%s283 + $0x58] sm:$0xff]
        %v320 = vld [vmem:[%s283 + $0x60] sm:$0xff]
        %v321 = vld [vmem:[%s283 + $0x68] sm:$0xff]
        %v322 = vld [vmem:[%s283 + $0x70] sm:$0xff]
        %v323 = vld [vmem:[%s283 + $0x78] sm:$0xff]
        %v324 = vld [vmem:[%s283 + $0x80] sm:$0xff]
        %v325 = vld [vmem:[%s283 + $0x88] sm:$0xff]
        %v326 = vld [vmem:[%s283 + $0x90] sm:$0xff]
        %v327 = vld [vmem:[%s283 + $0x98] sm:$0xff]
        %v328 = vld [vmem:[%s283 + $0xa0] sm:$0xff]
        %v329 = vld [vmem:[%s283 + $0xa8] sm:$0xff]
        %v330 = vld [vmem:[%s283 + $0xb0] sm:$0xff]
        %v331 = vld [vmem:[%s283 + $0xb8] sm:$0xff]
        %v332 = vld [vmem:[%s283 + $0xc0] sm:$0xff]
        %v333 = vld [vmem:[%s283 + $0xc8] sm:$0xff]
        %v334 = vld [vmem:[%s283 + $0xd0] sm:$0xff]
        %v335 = vld [vmem:[%s283 + $0xd8] sm:$0xff]
        %v336 = vld [vmem:[%s283 + $0xe0] sm:$0xff]
        %v337 = vld [vmem:[%s283 + $0xe8] sm:$0xff]
        %v338 = vld [vmem:[%s283 + $0xf0] sm:$0xff]
        %v339 = vld [vmem:[%s283 + $0xf8] sm:$0xff]
        %v340 = vld [vmem:[%s293] sm:$0xf]
        %v341 = vld [vmem:[%s293 + $0x4] sm:$0xf]
        %v342 = vld [vmem:[%s293 + $0x8] sm:$0xf]
        %v343 = vld [vmem:[%s293 + $0xc] sm:$0xf]
        %v344 = vld [vmem:[%s293 + $0x10] sm:$0xf]
        %v345 = vld [vmem:[%s293 + $0x14] sm:$0xf]
        %v346 = vld [vmem:[%s293 + $0x18] sm:$0xf]
        %v347 = vld [vmem:[%s293 + $0x1c] sm:$0xf]
        %v348 = vld [vmem:[%s293 + $0x20] sm:$0xf]
        %v349 = vld [vmem:[%s293 + $0x24] sm:$0xf]
        %v350 = vld [vmem:[%s293 + $0x28] sm:$0xf]
        %v351 = vld [vmem:[%s293 + $0x2c] sm:$0xf]
        %v352 = vld [vmem:[%s293 + $0x30] sm:$0xf]
        %v353 = vld [vmem:[%s293 + $0x34] sm:$0xf]
        %v354 = vld [vmem:[%s293 + $0x38] sm:$0xf]
        %v355 = vld [vmem:[%s293 + $0x3c] sm:$0xf]
        %v356 = vld [vmem:[%s293 + $0x40] sm:$0xf]
        %v357 = vld [vmem:[%s293 + $0x44] sm:$0xf]
        %v358 = vld [vmem:[%s293 + $0x48] sm:$0x3]
        %v391 = vunpack.c.l.b16 %v308
        %v392 = vunpack.c.h.b16 %v308
        %v393 = vunpack.c.l.b16 %v309
        %v394 = vunpack.c.h.b16 %v309
        %v395 = vunpack.c.l.b16 %v310
        %v396 = vunpack.c.h.b16 %v310
        %v397 = vunpack.c.l.b16 %v311
        %v398 = vunpack.c.h.b16 %v311
        %v399 = vunpack.c.l.b16 %v312
        %v400 = vunpack.c.h.b16 %v312
        %v401 = vunpack.c.l.b16 %v313
        %v402 = vunpack.c.h.b16 %v313
        %v403 = vunpack.c.l.b16 %v314
        %v404 = vunpack.c.h.b16 %v314
        %v405 = vunpack.c.l.b16 %v315
        %v406 = vunpack.c.h.b16 %v315
        %v407 = vunpack.c.l.b16 %v316
        %v408 = vunpack.c.h.b16 %v316
        %v409 = vunpack.c.l.b16 %v317
        %v410 = vunpack.c.h.b16 %v317
        %v411 = vunpack.c.l.b16 %v318
        %v412 = vunpack.c.h.b16 %v318
        %v413 = vunpack.c.l.b16 %v319
        %v414 = vunpack.c.h.b16 %v319
        %v415 = vunpack.c.l.b16 %v320
        %v416 = vunpack.c.h.b16 %v320
        %v417 = vunpack.c.l.b16 %v321
        %v418 = vunpack.c.h.b16 %v321
        %v419 = vunpack.c.l.b16 %v322
        %v420 = vunpack.c.h.b16 %v322
        %v421 = vunpack.c.l.b16 %v323
        %v422 = vunpack.c.h.b16 %v323
        %v423 = vunpack.c.l.b16 %v324
        %v424 = vunpack.c.h.b16 %v324
        %v425 = vunpack.c.l.b16 %v325
        %v426 = vunpack.c.h.b16 %v325
        %v427 = vunpack.c.l.b16 %v326
        %v428 = vunpack.c.h.b16 %v326
        %v429 = vunpack.c.l.b16 %v327
        %v430 = vunpack.c.h.b16 %v327
        %v431 = vunpack.c.l.b16 %v328
        %v432 = vunpack.c.h.b16 %v328
        %v433 = vunpack.c.l.b16 %v329
        %v434 = vunpack.c.h.b16 %v329
        %v435 = vunpack.c.l.b16 %v330
        %v436 = vunpack.c.h.b16 %v330
        %v437 = vunpack.c.l.b16 %v331
        %v438 = vunpack.c.h.b16 %v331
        %v439 = vunpack.c.l.b16 %v332
        %v440 = vunpack.c.h.b16 %v332
        %v441 = vunpack.c.l.b16 %v333
        %v442 = vunpack.c.h.b16 %v333
        %v443 = vunpack.c.l.b16 %v334
        %v444 = vunpack.c.h.b16 %v334
        %v445 = vunpack.c.l.b16 %v335
        %v446 = vunpack.c.h.b16 %v335
        %v447 = vunpack.c.l.b16 %v336
        %v448 = vunpack.c.h.b16 %v336
        %v449 = vunpack.c.l.b16 %v337
        %v450 = vunpack.c.h.b16 %v337
        %v451 = vunpack.c.l.b16 %v338
        %v452 = vunpack.c.h.b16 %v338
        %v453 = vunpack.c.l.b16 %v339
        %v454 = vunpack.c.h.b16 %v339
        %v455 = vpack.c.b16 %v393, %v391
        %v456 = vpack.c.b16 %v394, %v392
        %v457 = vpack.c.b16 %v397, %v395
        %v458 = vpack.c.b16 %v398, %v396
        %v459 = vpack.c.b16 %v401, %v399
        %v460 = vpack.c.b16 %v402, %v400
        %v461 = vpack.c.b16 %v405, %v403
        %v462 = vpack.c.b16 %v406, %v404
        %v463 = vpack.c.b16 %v409, %v407
        %v464 = vpack.c.b16 %v410, %v408
        %v465 = vpack.c.b16 %v413, %v411
        %v466 = vpack.c.b16 %v414, %v412
        %v467 = vpack.c.b16 %v417, %v415
        %v468 = vpack.c.b16 %v418, %v416
        %v469 = vpack.c.b16 %v421, %v419
        %v470 = vpack.c.b16 %v422, %v420
        %v471 = vpack.c.b16 %v425, %v423
        %v472 = vpack.c.b16 %v426, %v424
        %v473 = vpack.c.b16 %v429, %v427
        %v474 = vpack.c.b16 %v430, %v428
        %v475 = vpack.c.b16 %v433, %v431
        %v476 = vpack.c.b16 %v434, %v432
        %v477 = vpack.c.b16 %v437, %v435
        %v478 = vpack.c.b16 %v438, %v436
        %v479 = vpack.c.b16 %v441, %v439
        %v480 = vpack.c.b16 %v442, %v440
        %v481 = vpack.c.b16 %v445, %v443
        %v482 = vpack.c.b16 %v446, %v444
        %v483 = vpack.c.b16 %v449, %v447
        %v484 = vpack.c.b16 %v450, %v448
        %v485 = vpack.c.b16 %v453, %v451
        %v486 = vpack.c.b16 %v454, %v452
        %v522 = vunpack.c.l.b16 %v340
        %v523 = vunpack.c.l.b16 %v341
        %v524 = vunpack.c.l.b16 %v342
        %v525 = vunpack.c.l.b16 %v343
        %v526 = vunpack.c.l.b16 %v344
        %v527 = vunpack.c.l.b16 %v345
        %v528 = vunpack.c.l.b16 %v346
        %v529 = vunpack.c.l.b16 %v347
        %v530 = vunpack.c.l.b16 %v348
        %v531 = vunpack.c.l.b16 %v349
        %v532 = vunpack.c.l.b16 %v350
        %v533 = vunpack.c.l.b16 %v351
        %v534 = vunpack.c.l.b16 %v352
        %v535 = vunpack.c.l.b16 %v353
        %v536 = vunpack.c.l.b16 %v354
        %v537 = vunpack.c.l.b16 %v355
        %v538 = vunpack.c.l.b16 %v356
        %v539 = vunpack.c.l.b16 %v357
        %v540 = vunpack.c.l.b16 %v358
        %v541 = vpack.c.b16 %v523, %v522
        %v542 = vpack.c.b16 %v525, %v524
        %v543 = vpack.c.b16 %v527, %v526
        %v544 = vpack.c.b16 %v529, %v528
        %v545 = vpack.c.b16 %v531, %v530
        %v546 = vpack.c.b16 %v533, %v532
        %v547 = vpack.c.b16 %v535, %v534
        %v548 = vpack.c.b16 %v537, %v536
        %v549 = vpack.c.b16 %v539, %v538
        %v550 = vpack.c.b16 %v540, %v540
        %vm560 = vcmask 154624
        %v562 = vsel %vm560, %v456, 0
        %v565 = vsel %vm560, %v458, 0
        %v568 = vsel %vm560, %v460, 0
        %v571 = vsel %vm560, %v462, 0
        %v574 = vsel %vm560, %v464, 0
        %v577 = vsel %vm560, %v466, 0
        %v580 = vsel %vm560, %v468, 0
        %v583 = vsel %vm560, %v470, 0
        %v586 = vsel %vm560, %v472, 0
        %v589 = vsel %vm560, %v474, 0
        %v592 = vsel %vm560, %v476, 0
        %v595 = vsel %vm560, %v478, 0
        %v598 = vsel %vm560, %v480, 0
        %v601 = vsel %vm560, %v482, 0
        %v604 = vsel %vm560, %v484, 0
        %v607 = vsel %vm560, %v486, 0
        %vm609 = vcmask 1040384
        %vm610 = vcmask 1041408
        %v611 = vsel %vm609, 4294967295, 65535
        %v612 = vsel %vm610, %v611, 0
        %v614 = vand.u32 %v550, %v612
        %616 = vmatprep.subr.bf16.mxu0 0
        %617 = vmatpush1.bf16.msra.mxu0 %v541
        %618 = vmatprep.subr.bf16.mxu0 0
        %619 = vmatpush1.bf16.msra.mxu0 %v542
        %620 = vmatprep.subr.bf16.mxu0 0
        %621 = vmatpush1.bf16.msra.mxu0 %v543
        %622 = vmatprep.subr.bf16.mxu0 0
        %623 = vmatpush1.bf16.msra.mxu0 %v544
        %624 = vmatprep.subr.bf16.mxu0 0
        %625 = vmatpush1.bf16.msra.mxu0 %v545
        %626 = vmatprep.subr.bf16.mxu0 0
        %627 = vmatpush1.bf16.msra.mxu0 %v546
        %628 = vmatprep.subr.bf16.mxu0 0
        %629 = vmatpush1.bf16.msra.mxu0 %v547
        %630 = vmatprep.subr.bf16.mxu0 0
        %631 = vmatpush1.bf16.msra.mxu0 %v548
        %632 = vmatprep.subr.bf16.mxu0 0
        %633 = vmatpush1.bf16.msra.mxu0 %v549
        %634 = vmatprep.subr.bf16.mxu0 0
        %635 = vmatpush1.bf16.msra.mxu0 %v614
        %636 = vmatprep.subr.bf16.mxu0 0
        %637 = vmatpush1.bf16.msra.mxu0 0
        %638 = vmatprep.subr.bf16.mxu0 0
        %639 = vmatpush1.bf16.msra.mxu0 0
        %640 = vmatprep.subr.bf16.mxu0 0
        %641 = vmatpush1.bf16.msra.mxu0 0
        %642 = vmatprep.subr.bf16.mxu0 0
        %643 = vmatpush1.bf16.msra.mxu0 0
        %644 = vmatprep.subr.bf16.mxu0 0
        %645 = vmatpush1.bf16.msra.mxu0 0
        %646 = vmatprep.subr.bf16.mxu0 0
        %647 = vmatpush1.bf16.msra.mxu0 0
        %648 = vmatprep.mubr.bf16.mxu0 %v562
        %649 = vmatmul.mubr.bf16.gmra.mrb[0].mxu0 %v455
        %v650 = vpop.f32.mrb[0].mxu0
        %v651 = vadd.f32 0.0, %v650
        %v652 = vpop.f32.mrb[0].mxu0
        %v653 = vpop.f32.mrb[0].mxu0
        %v654 = vadd.f32 0.0, %v653
        %v655 = vpop.f32.mrb[0].mxu0
        %656 = vmatprep.mubr.bf16.mxu0 %v565
        %657 = vmatmul.mubr.bf16.gmra.mrb[0].mxu0 %v457
        %v658 = vpop.f32.mrb[0].mxu0
        %v659 = vadd.f32 0.0, %v658
        %v660 = vpop.f32.mrb[0].mxu0
        %v661 = vpop.f32.mrb[0].mxu0
        %v662 = vadd.f32 0.0, %v661
        %v663 = vpop.f32.mrb[0].mxu0
        %664 = vmatprep.mubr.bf16.mxu0 %v568
        %665 = vmatmul.mubr.bf16.gmra.mrb[0].mxu0 %v459
        %v666 = vpop.f32.mrb[0].mxu0
        %v667 = vadd.f32 0.0, %v666
        %v668 = vpop.f32.mrb[0].mxu0
        %v669 = vpop.f32.mrb[0].mxu0
        %v670 = vadd.f32 0.0, %v669
        %v671 = vpop.f32.mrb[0].mxu0
        %672 = vmatprep.mubr.bf16.mxu0 %v571
        %673 = vmatmul.mubr.bf16.gmra.mrb[0].mxu0 %v461
        %v674 = vpop.f32.mrb[0].mxu0
        %v675 = vadd.f32 0.0, %v674
        %v676 = vpop.f32.mrb[0].mxu0
        %v677 = vpop.f32.mrb[0].mxu0
        %v678 = vadd.f32 0.0, %v677
        %v679 = vpop.f32.mrb[0].mxu0
        %680 = vmatprep.mubr.bf16.mxu0 %v574
        %681 = vmatmul.mubr.bf16.gmra.mrb[0].mxu0 %v463
        %v682 = vpop.f32.mrb[0].mxu0
        %v683 = vadd.f32 0.0, %v682
        %v684 = vpop.f32.mrb[0].mxu0
        %v685 = vpop.f32.mrb[0].mxu0
        %v686 = vadd.f32 0.0, %v685
        %v687 = vpop.f32.mrb[0].mxu0
        %688 = vmatprep.mubr.bf16.mxu0 %v577
        %689 = vmatmul.mubr.bf16.gmra.mrb[0].mxu0 %v465
        %v690 = vpop.f32.mrb[0].mxu0
        %v691 = vadd.f32 0.0, %v690
        %v692 = vpop.f32.mrb[0].mxu0
        %v693 = vpop.f32.mrb[0].mxu0
        %v694 = vadd.f32 0.0, %v693
        %v695 = vpop.f32.mrb[0].mxu0
        %696 = vmatprep.mubr.bf16.mxu0 %v580
        %697 = vmatmul.mubr.bf16.gmra.mrb[0].mxu0 %v467
        %v698 = vpop.f32.mrb[0].mxu0
        %v699 = vadd.f32 0.0, %v698
        %v700 = vpop.f32.mrb[0].mxu0
        %v701 = vpop.f32.mrb[0].mxu0
        %v702 = vadd.f32 0.0, %v701
        %v703 = vpop.f32.mrb[0].mxu0
        %704 = vmatprep.mubr.bf16.mxu0 %v583
        %705 = vmatmul.mubr.bf16.gmra.mrb[0].mxu0 %v469
        %v706 = vpop.f32.mrb[0].mxu0
        %v707 = vadd.f32 0.0, %v706
        %v708 = vpop.f32.mrb[0].mxu0
        %v709 = vpop.f32.mrb[0].mxu0
        %v710 = vadd.f32 0.0, %v709
        %v711 = vpop.f32.mrb[0].mxu0
        %712 = vmatprep.mubr.bf16.mxu0 %v586
        %713 = vmatmul.mubr.bf16.gmra.mrb[0].mxu0 %v471
        %v714 = vpop.f32.mrb[0].mxu0
        %v715 = vadd.f32 0.0, %v714
        %v716 = vpop.f32.mrb[0].mxu0
        %v717 = vpop.f32.mrb[0].mxu0
        %v718 = vadd.f32 0.0, %v717
        %v719 = vpop.f32.mrb[0].mxu0
        %720 = vmatprep.mubr.bf16.mxu0 %v589
        %721 = vmatmul.mubr.bf16.gmra.mrb[0].mxu0 %v473
        %v722 = vpop.f32.mrb[0].mxu0
        %v723 = vadd.f32 0.0, %v722
        %v724 = vpop.f32.mrb[0].mxu0
        %v725 = vpop.f32.mrb[0].mxu0
        %v726 = vadd.f32 0.0, %v725
        %v727 = vpop.f32.mrb[0].mxu0
        %728 = vmatprep.mubr.bf16.mxu0 %v592
        %729 = vmatmul.mubr.bf16.gmra.mrb[0].mxu0 %v475
        %v730 = vpop.f32.mrb[0].mxu0
        %v731 = vadd.f32 0.0, %v730
        %v732 = vpop.f32.mrb[0].mxu0
        %v733 = vpop.f32.mrb[0].mxu0
        %v734 = vadd.f32 0.0, %v733
        %v735 = vpop.f32.mrb[0].mxu0
        %736 = vmatprep.mubr.bf16.mxu0 %v595
        %737 = vmatmul.mubr.bf16.gmra.mrb[0].mxu0 %v477
        %v738 = vpop.f32.mrb[0].mxu0
        %v739 = vadd.f32 0.0, %v738
        %v740 = vpop.f32.mrb[0].mxu0
        %v741 = vpop.f32.mrb[0].mxu0
        %v742 = vadd.f32 0.0, %v741
        %v743 = vpop.f32.mrb[0].mxu0
        %744 = vmatprep.mubr.bf16.mxu0 %v598
        %745 = vmatmul.mubr.bf16.gmra.mrb[0].mxu0 %v479
        %v746 = vpop.f32.mrb[0].mxu0
        %v747 = vadd.f32 0.0, %v746
        %v748 = vpop.f32.mrb[0].mxu0
        %v749 = vpop.f32.mrb[0].mxu0
        %v750 = vadd.f32 0.0, %v749
        %v751 = vpop.f32.mrb[0].mxu0
        %752 = vmatprep.mubr.bf16.mxu0 %v601
        %753 = vmatmul.mubr.bf16.gmra.mrb[0].mxu0 %v481
        %v754 = vpop.f32.mrb[0].mxu0
        %v755 = vadd.f32 0.0, %v754
        %v756 = vpop.f32.mrb[0].mxu0
        %v757 = vpop.f32.mrb[0].mxu0
        %v758 = vadd.f32 0.0, %v757
        %v759 = vpop.f32.mrb[0].mxu0
        %760 = vmatprep.mubr.bf16.mxu0 %v604
        %761 = vmatmul.mubr.bf16.gmra.mrb[0].mxu0 %v483
        %v762 = vpop.f32.mrb[0].mxu0
        %v763 = vadd.f32 0.0, %v762
        %v764 = vpop.f32.mrb[0].mxu0
        %v765 = vpop.f32.mrb[0].mxu0
        %v766 = vadd.f32 0.0, %v765
        %v767 = vpop.f32.mrb[0].mxu0
        %768 = vmatprep.mubr.bf16.mxu0 %v607
        %769 = vmatmul.mubr.bf16.gmra.mrb[0].mxu0 %v485
        %v770 = vpop.f32.mrb[0].mxu0
        %v771 = vadd.f32 0.0, %v770
        %v772 = vpop.f32.mrb[0].mxu0
        %v773 = vpop.f32.mrb[0].mxu0
        %v774 = vadd.f32 0.0, %v773
        %v775 = vpop.f32.mrb[0].mxu0
        %776 = vdwg.mxu0
        %p777 = scmp.eq.s32.totalorder %s26, 0
        // Predicated region
        $region33: #{_matmul_padded.1} parent=31 // pred_check
          %p778 = pneg %p777
        $region34: #{_matmul_padded.1} parent=31 // pred_check_branch
          %780 = sbr.rel (%p778) target = $region36
        $region35: #{_matmul_padded.1} parent=31 // pred_region
          %v781 = vld [vmem:[%s297] sm:$0x1]
          %v783 = vlaneseq
          %v784 = vshrl.u32 %v783, 7
          %v785 = vsub.s32 0, %v784
          %v786 = vrot.slane %v781, %v785
          %v788 = vadd.f32 %v651, %v786
          %v789 = vadd.f32 %v654, %v786
          %v790 = vadd.f32 %v659, %v786
          %v791 = vadd.f32 %v662, %v786
          %v792 = vadd.f32 %v667, %v786
          %v793 = vadd.f32 %v670, %v786
          %v794 = vadd.f32 %v675, %v786
          %v795 = vadd.f32 %v678, %v786
          %v796 = vadd.f32 %v683, %v786
          %v797 = vadd.f32 %v686, %v786
          %v798 = vadd.f32 %v691, %v786
          %v799 = vadd.f32 %v694, %v786
          %v800 = vadd.f32 %v699, %v786
          %v801 = vadd.f32 %v702, %v786
          %v802 = vadd.f32 %v707, %v786
          %v803 = vadd.f32 %v710, %v786
          %v804 = vadd.f32 %v715, %v786
          %v805 = vadd.f32 %v718, %v786
          %v806 = vadd.f32 %v723, %v786
          %v807 = vadd.f32 %v726, %v786
          %v808 = vadd.f32 %v731, %v786
          %v809 = vadd.f32 %v734, %v786
          %v810 = vadd.f32 %v739, %v786
          %v811 = vadd.f32 %v742, %v786
          %v812 = vadd.f32 %v747, %v786
          %v813 = vadd.f32 %v750, %v786
          %v814 = vadd.f32 %v755, %v786
          %v815 = vadd.f32 %v758, %v786
          %v816 = vadd.f32 %v763, %v786
          %v817 = vadd.f32 %v766, %v786
          %v818 = vadd.f32 %v771, %v786
          %v819 = vadd.f32 %v774, %v786
          %vm820 = vcmask 523264
          %821 = vst.msk [vmem:[%s305] sm:$0xff] %vm820, %v788
          %822 = vst.msk [vmem:[%s305 + $0x8] sm:$0xff] %vm820, %v789
          %823 = vst.msk [vmem:[%s305 + $0x10] sm:$0xff] %vm820, %v790
          %824 = vst.msk [vmem:[%s305 + $0x18] sm:$0xff] %vm820, %v791
          %825 = vst.msk [vmem:[%s305 + $0x20] sm:$0xff] %vm820, %v792
          %826 = vst.msk [vmem:[%s305 + $0x28] sm:$0xff] %vm820, %v793
          %827 = vst.msk [vmem:[%s305 + $0x30] sm:$0xff] %vm820, %v794
          %828 = vst.msk [vmem:[%s305 + $0x38] sm:$0xff] %vm820, %v795
          %829 = vst.msk [vmem:[%s305 + $0x40] sm:$0xff] %vm820, %v796
          %830 = vst.msk [vmem:[%s305 + $0x48] sm:$0xff] %vm820, %v797
          %831 = vst.msk [vmem:[%s305 + $0x50] sm:$0xff] %vm820, %v798
          %832 = vst.msk [vmem:[%s305 + $0x58] sm:$0xff] %vm820, %v799
          %833 = vst.msk [vmem:[%s305 + $0x60] sm:$0xff] %vm820, %v800
          %834 = vst.msk [vmem:[%s305 + $0x68] sm:$0xff] %vm820, %v801
          %835 = vst.msk [vmem:[%s305 + $0x70] sm:$0xff] %vm820, %v802
          %836 = vst.msk [vmem:[%s305 + $0x78] sm:$0xff] %vm820, %v803
          %837 = vst.msk [vmem:[%s305 + $0x80] sm:$0xff] %vm820, %v804
          %838 = vst.msk [vmem:[%s305 + $0x88] sm:$0xff] %vm820, %v805
          %839 = vst.msk [vmem:[%s305 + $0x90] sm:$0xff] %vm820, %v806
          %840 = vst.msk [vmem:[%s305 + $0x98] sm:$0xff] %vm820, %v807
          %841 = vst.msk [vmem:[%s305 + $0xa0] sm:$0xff] %vm820, %v808
          %842 = vst.msk [vmem:[%s305 + $0xa8] sm:$0xff] %vm820, %v809
          %843 = vst.msk [vmem:[%s305 + $0xb0] sm:$0xff] %vm820, %v810
          %844 = vst.msk [vmem:[%s305 + $0xb8] sm:$0xff] %vm820, %v811
          %845 = vst.msk [vmem:[%s305 + $0xc0] sm:$0xff] %vm820, %v812
          %846 = vst.msk [vmem:[%s305 + $0xc8] sm:$0xff] %vm820, %v813
          %847 = vst.msk [vmem:[%s305 + $0xd0] sm:$0xff] %vm820, %v814
          %848 = vst.msk [vmem:[%s305 + $0xd8] sm:$0xff] %vm820, %v815
          %849 = vst.msk [vmem:[%s305 + $0xe0] sm:$0xff] %vm820, %v816
          %850 = vst.msk [vmem:[%s305 + $0xe8] sm:$0xff] %vm820, %v817
          %851 = vst.msk [vmem:[%s305 + $0xf0] sm:$0xff] %vm820, %v818
          %852 = vst.msk [vmem:[%s305 + $0xf8] sm:$0xff] %vm820, %v819
        $region36: #{_matmul_padded.1} parent=31 // pred_fallthru
          _
        %p853 = scmp.ne.s32.totalorder %s26, 0
        // Predicated region
        $region37: #{_matmul_padded.1} parent=31 // pred_check
          %p854 = pneg %p853
        $region38: #{_matmul_padded.1} parent=31 // pred_check_branch
          %856 = sbr.rel (%p854) target = $region40
        $region39: #{_matmul_padded.1} parent=31 // pred_region
          %v857 = vld [vmem:[%s305] sm:$0xff]
          %v858 = vld [vmem:[%s305 + $0x8] sm:$0xff]
          %v859 = vld [vmem:[%s305 + $0x10] sm:$0xff]
          %v860 = vld [vmem:[%s305 + $0x18] sm:$0xff]
          %v861 = vld [vmem:[%s305 + $0x20] sm:$0xff]
          %v862 = vld [vmem:[%s305 + $0x28] sm:$0xff]
          %v863 = vld [vmem:[%s305 + $0x30] sm:$0xff]
          %v864 = vld [vmem:[%s305 + $0x38] sm:$0xff]
          %v865 = vld [vmem:[%s305 + $0x40] sm:$0xff]
          %v866 = vld [vmem:[%s305 + $0x48] sm:$0xff]
          %v867 = vld [vmem:[%s305 + $0x50] sm:$0xff]
          %v868 = vld [vmem:[%s305 + $0x58] sm:$0xff]
          %v869 = vld [vmem:[%s305 + $0x60] sm:$0xff]
          %v870 = vld [vmem:[%s305 + $0x68] sm:$0xff]
          %v871 = vld [vmem:[%s305 + $0x70] sm:$0xff]
          %v872 = vld [vmem:[%s305 + $0x78] sm:$0xff]
          %v873 = vld [vmem:[%s305 + $0x80] sm:$0xff]
          %v874 = vld [vmem:[%s305 + $0x88] sm:$0xff]
          %v875 = vld [vmem:[%s305 + $0x90] sm:$0xff]
          %v876 = vld [vmem:[%s305 + $0x98] sm:$0xff]
          %v877 = vld [vmem:[%s305 + $0xa0] sm:$0xff]
          %v878 = vld [vmem:[%s305 + $0xa8] sm:$0xff]
          %v879 = vld [vmem:[%s305 + $0xb0] sm:$0xff]
          %v880 = vld [vmem:[%s305 + $0xb8] sm:$0xff]
          %v881 = vld [vmem:[%s305 + $0xc0] sm:$0xff]
          %v882 = vld [vmem:[%s305 + $0xc8] sm:$0xff]
          %v883 = vld [vmem:[%s305 + $0xd0] sm:$0xff]
          %v884 = vld [vmem:[%s305 + $0xd8] sm:$0xff]
          %v885 = vld [vmem:[%s305 + $0xe0] sm:$0xff]
          %v886 = vld [vmem:[%s305 + $0xe8] sm:$0xff]
          %v887 = vld [vmem:[%s305 + $0xf0] sm:$0xff]
          %v888 = vld [vmem:[%s305 + $0xf8] sm:$0xff]
          %v889 = vadd.f32 %v857, %v651
          %v890 = vadd.f32 %v858, %v654
          %v891 = vadd.f32 %v859, %v659
          %v892 = vadd.f32 %v860, %v662
          %v893 = vadd.f32 %v861, %v667
          %v894 = vadd.f32 %v862, %v670
          %v895 = vadd.f32 %v863, %v675
          %v896 = vadd.f32 %v864, %v678
          %v897 = vadd.f32 %v865, %v683
          %v898 = vadd.f32 %v866, %v686
          %v899 = vadd.f32 %v867, %v691
          %v900 = vadd.f32 %v868, %v694
          %v901 = vadd.f32 %v869, %v699
          %v902 = vadd.f32 %v870, %v702
          %v903 = vadd.f32 %v871, %v707
          %v904 = vadd.f32 %v872, %v710
          %v905 = vadd.f32 %v873, %v715
          %v906 = vadd.f32 %v874, %v718
          %v907 = vadd.f32 %v875, %v723
          %v908 = vadd.f32 %v876, %v726
          %v909 = vadd.f32 %v877, %v731
          %v910 = vadd.f32 %v878, %v734
          %v911 = vadd.f32 %v879, %v739
          %v912 = vadd.f32 %v880, %v742
          %v913 = vadd.f32 %v881, %v747
          %v914 = vadd.f32 %v882, %v750
          %v915 = vadd.f32 %v883, %v755
          %v916 = vadd.f32 %v884, %v758
          %v917 = vadd.f32 %v885, %v763
          %v918 = vadd.f32 %v886, %v766
          %v919 = vadd.f32 %v887, %v771
          %v920 = vadd.f32 %v888, %v774
          %vm921 = vcmask 523264
          %922 = vst.msk [vmem:[%s305] sm:$0xff] %vm921, %v889
          %923 = vst.msk [vmem:[%s305 + $0x8] sm:$0xff] %vm921, %v890
          %924 = vst.msk [vmem:[%s305 + $0x10] sm:$0xff] %vm921, %v891
          %925 = vst.msk [vmem:[%s305 + $0x18] sm:$0xff] %vm921, %v892
          %926 = vst.msk [vmem:[%s305 + $0x20] sm:$0xff] %vm921, %v893
          %927 = vst.msk [vmem:[%s305 + $0x28] sm:$0xff] %vm921, %v894
          %928 = vst.msk [vmem:[%s305 + $0x30] sm:$0xff] %vm921, %v895
          %929 = vst.msk [vmem:[%s305 + $0x38] sm:$0xff] %vm921, %v896
          %930 = vst.msk [vmem:[%s305 + $0x40] sm:$0xff] %vm921, %v897
          %931 = vst.msk [vmem:[%s305 + $0x48] sm:$0xff] %vm921, %v898
          %932 = vst.msk [vmem:[%s305 + $0x50] sm:$0xff] %vm921, %v899
          %933 = vst.msk [vmem:[%s305 + $0x58] sm:$0xff] %vm921, %v900
          %934 = vst.msk [vmem:[%s305 + $0x60] sm:$0xff] %vm921, %v901
          %935 = vst.msk [vmem:[%s305 + $0x68] sm:$0xff] %vm921, %v902
          %936 = vst.msk [vmem:[%s305 + $0x70] sm:$0xff] %vm921, %v903
          %937 = vst.msk [vmem:[%s305 + $0x78] sm:$0xff] %vm921, %v904
          %938 = vst.msk [vmem:[%s305 + $0x80] sm:$0xff] %vm921, %v905
          %939 = vst.msk [vmem:[%s305 + $0x88] sm:$0xff] %vm921, %v906
          %940 = vst.msk [vmem:[%s305 + $0x90] sm:$0xff] %vm921, %v907
          %941 = vst.msk [vmem:[%s305 + $0x98] sm:$0xff] %vm921, %v908
          %942 = vst.msk [vmem:[%s305 + $0xa0] sm:$0xff] %vm921, %v909
          %943 = vst.msk [vmem:[%s305 + $0xa8] sm:$0xff] %vm921, %v910
          %944 = vst.msk [vmem:[%s305 + $0xb0] sm:$0xff] %vm921, %v911
          %945 = vst.msk [vmem:[%s305 + $0xb8] sm:$0xff] %vm921, %v912
          %946 = vst.msk [vmem:[%s305 + $0xc0] sm:$0xff] %vm921, %v913
          %947 = vst.msk [vmem:[%s305 + $0xc8] sm:$0xff] %vm921, %v914
          %948 = vst.msk [vmem:[%s305 + $0xd0] sm:$0xff] %vm921, %v915
          %949 = vst.msk [vmem:[%s305 + $0xd8] sm:$0xff] %vm921, %v916
          %950 = vst.msk [vmem:[%s305 + $0xe0] sm:$0xff] %vm921, %v917
          %951 = vst.msk [vmem:[%s305 + $0xe8] sm:$0xff] %vm921, %v918
          %952 = vst.msk [vmem:[%s305 + $0xf0] sm:$0xff] %vm921, %v919
          %953 = vst.msk [vmem:[%s305 + $0xf8] sm:$0xff] %vm921, %v920
        $region40: #{_matmul_padded.1} parent=31 // pred_fallthru
          _
        // Predicated region
        $region41: #{_matmul_padded.1} parent=31 // pred_check
          %p954 = pneg %p777
        $region42: #{_matmul_padded.1} parent=31 // pred_check_branch
          %956 = sbr.rel (%p954) target = $region44
        $region43: #{_matmul_padded.1} parent=31 // pred_region
          %v957 = vld [vmem:[%s305] sm:$0xff]
          %v958 = vld [vmem:[%s305 + $0x8] sm:$0xff]
          %v959 = vld [vmem:[%s305 + $0x10] sm:$0xff]
          %v960 = vld [vmem:[%s305 + $0x18] sm:$0xff]
          %v961 = vld [vmem:[%s305 + $0x20] sm:$0xff]
          %v962 = vld [vmem:[%s305 + $0x28] sm:$0xff]
          %v963 = vld [vmem:[%s305 + $0x30] sm:$0xff]
          %v964 = vld [vmem:[%s305 + $0x38] sm:$0xff]
          %v965 = vld [vmem:[%s305 + $0x40] sm:$0xff]
          %v966 = vld [vmem:[%s305 + $0x48] sm:$0xff]
          %v967 = vld [vmem:[%s305 + $0x50] sm:$0xff]
          %v968 = vld [vmem:[%s305 + $0x58] sm:$0xff]
          %v969 = vld [vmem:[%s305 + $0x60] sm:$0xff]
          %v970 = vld [vmem:[%s305 + $0x68] sm:$0xff]
          %v971 = vld [vmem:[%s305 + $0x70] sm:$0xff]
          %v972 = vld [vmem:[%s305 + $0x78] sm:$0xff]
          %v973 = vld [vmem:[%s305 + $0x80] sm:$0xff]
          %v974 = vld [vmem:[%s305 + $0x88] sm:$0xff]
          %v975 = vld [vmem:[%s305 + $0x90] sm:$0xff]
          %v976 = vld [vmem:[%s305 + $0x98] sm:$0xff]
          %v977 = vld [vmem:[%s305 + $0xa0] sm:$0xff]
          %v978 = vld [vmem:[%s305 + $0xa8] sm:$0xff]
          %v979 = vld [vmem:[%s305 + $0xb0] sm:$0xff]
          %v980 = vld [vmem:[%s305 + $0xb8] sm:$0xff]
          %v981 = vld [vmem:[%s305 + $0xc0] sm:$0xff]
          %v982 = vld [vmem:[%s305 + $0xc8] sm:$0xff]
          %v983 = vld [vmem:[%s305 + $0xd0] sm:$0xff]
          %v984 = vld [vmem:[%s305 + $0xd8] sm:$0xff]
          %v985 = vld [vmem:[%s305 + $0xe0] sm:$0xff]
          %v986 = vld [vmem:[%s305 + $0xe8] sm:$0xff]
          %v987 = vld [vmem:[%s305 + $0xf0] sm:$0xff]
          %v988 = vld [vmem:[%s305 + $0xf8] sm:$0xff]
          %vm989 = vcmask 523264
          %v990 = vsel %vm989, %v957, 0.0
          %v991 = vsel %vm989, %v958, 0.0
          %v992 = vadd.f32 %v990, %v991
          %v993 = vsel %vm989, %v959, 0.0
          %v994 = vadd.f32 %v992, %v993
          %v995 = vsel %vm989, %v960, 0.0
          %v996 = vadd.f32 %v994, %v995
          %v997 = vsel %vm989, %v961, 0.0
          %v998 = vadd.f32 %v996, %v997
          %v999 = vsel %vm989, %v962, 0.0
          %v1000 = vadd.f32 %v998, %v999
          %v1001 = vsel %vm989, %v963, 0.0
          %v1002 = vadd.f32 %v1000, %v1001
          %v1003 = vsel %vm989, %v964, 0.0
          %v1004 = vadd.f32 %v1002, %v1003
          %v1005 = vsel %vm989, %v965, 0.0
          %v1006 = vadd.f32 %v1004, %v1005
          %v1007 = vsel %vm989, %v966, 0.0
          %v1008 = vadd.f32 %v1006, %v1007
          %v1009 = vsel %vm989, %v967, 0.0
          %v1010 = vadd.f32 %v1008, %v1009
          %v1011 = vsel %vm989, %v968, 0.0
          %v1012 = vadd.f32 %v1010, %v1011
          %v1013 = vsel %vm989, %v969, 0.0
          %v1014 = vadd.f32 %v1012, %v1013
          %v1015 = vsel %vm989, %v970, 0.0
          %v1016 = vadd.f32 %v1014, %v1015
          %v1017 = vsel %vm989, %v971, 0.0
          %v1018 = vadd.f32 %v1016, %v1017
          %v1019 = vsel %vm989, %v972, 0.0
          %v1020 = vadd.f32 %v1018, %v1019
          %v1021 = vsel %vm989, %v973, 0.0
          %v1022 = vadd.f32 %v1020, %v1021
          %v1023 = vsel %vm989, %v974, 0.0
          %v1024 = vadd.f32 %v1022, %v1023
          %v1025 = vsel %vm989, %v975, 0.0
          %v1026 = vadd.f32 %v1024, %v1025
          %v1027 = vsel %vm989, %v976, 0.0
          %v1028 = vadd.f32 %v1026, %v1027
          %v1029 = vsel %vm989, %v977, 0.0
          %v1030 = vadd.f32 %v1028, %v1029
          %v1031 = vsel %vm989, %v978, 0.0
          %v1032 = vadd.f32 %v1030, %v1031
          %v1033 = vsel %vm989, %v979, 0.0
          %v1034 = vadd.f32 %v1032, %v1033
          %v1035 = vsel %vm989, %v980, 0.0
          %v1036 = vadd.f32 %v1034, %v1035
          %v1037 = vsel %vm989, %v981, 0.0
          %v1038 = vadd.f32 %v1036, %v1037
          %v1039 = vsel %vm989, %v982, 0.0
          %v1040 = vadd.f32 %v1038, %v1039
          %v1041 = vsel %vm989, %v983, 0.0
          %v1042 = vadd.f32 %v1040, %v1041
          %v1043 = vsel %vm989, %v984, 0.0
          %v1044 = vadd.f32 %v1042, %v1043
          %v1045 = vsel %vm989, %v985, 0.0
          %v1046 = vadd.f32 %v1044, %v1045
          %v1047 = vsel %vm989, %v986, 0.0
          %v1048 = vadd.f32 %v1046, %v1047
          %v1049 = vsel %vm989, %v987, 0.0
          %v1050 = vadd.f32 %v1048, %v1049
          %v1051 = vsel %vm989, %v988, 0.0
          %v1052 = vadd.f32 %v1050, %v1051
          %v1053 = vrot.slane %v1052, 4
          %v1054 = vadd.f32 %v1052, %v1053
          %v1055 = vrot.slane %v1054, 2
          %v1056 = vadd.f32 %v1054, %v1055
          %v1057 = vrot.slane %v1056, 1
          %v1058 = vadd.f32 %v1056, %v1057
          %v1059 = vmul.f32 %v957, %v957
          %v1060 = vmul.f32 %v958, %v958
          %v1061 = vmul.f32 %v959, %v959
          %v1062 = vmul.f32 %v960, %v960
          %v1063 = vmul.f32 %v961, %v961
          %v1064 = vmul.f32 %v962, %v962
          %v1065 = vmul.f32 %v963, %v963
          %v1066 = vmul.f32 %v964, %v964
          %v1067 = vmul.f32 %v965, %v965
          %v1068 = vmul.f32 %v966, %v966
          %v1069 = vmul.f32 %v967, %v967
          %v1070 = vmul.f32 %v968, %v968
          %v1071 = vmul.f32 %v969, %v969
          %v1072 = vmul.f32 %v970, %v970
          %v1073 = vmul.f32 %v971, %v971
          %v1074 = vmul.f32 %v972, %v972
          %v1075 = vmul.f32 %v973, %v973
          %v1076 = vmul.f32 %v974, %v974
          %v1077 = vmul.f32 %v975, %v975
          %v1078 = vmul.f32 %v976, %v976
          %v1079 = vmul.f32 %v977, %v977
          %v1080 = vmul.f32 %v978, %v978
          %v1081 = vmul.f32 %v979, %v979
          %v1082 = vmul.f32 %v980, %v980
          %v1083 = vmul.f32 %v981, %v981
          %v1084 = vmul.f32 %v982, %v982
          %v1085 = vmul.f32 %v983, %v983
          %v1086 = vmul.f32 %v984, %v984
          %v1087 = vmul.f32 %v985, %v985
          %v1088 = vmul.f32 %v986, %v986
          %v1089 = vmul.f32 %v987, %v987
          %v1090 = vmul.f32 %v988, %v988
          %v1091 = vsel %vm989, %v1059, 0.0
          %v1092 = vsel %vm989, %v1060, 0.0
          %v1093 = vadd.f32 %v1091, %v1092
          %v1094 = vsel %vm989, %v1061, 0.0
          %v1095 = vadd.f32 %v1093, %v1094
          %v1096 = vsel %vm989, %v1062, 0.0
          %v1097 = vadd.f32 %v1095, %v1096
          %v1098 = vsel %vm989, %v1063, 0.0
          %v1099 = vadd.f32 %v1097, %v1098
          %v1100 = vsel %vm989, %v1064, 0.0
          %v1101 = vadd.f32 %v1099, %v1100
          %v1102 = vsel %vm989, %v1065, 0.0
          %v1103 = vadd.f32 %v1101, %v1102
          %v1104 = vsel %vm989, %v1066, 0.0
          %v1105 = vadd.f32 %v1103, %v1104
          %v1106 = vsel %vm989, %v1067, 0.0
          %v1107 = vadd.f32 %v1105, %v1106
          %v1108 = vsel %vm989, %v1068, 0.0
          %v1109 = vadd.f32 %v1107, %v1108
          %v1110 = vsel %vm989, %v1069, 0.0
          %v1111 = vadd.f32 %v1109, %v1110
          %v1112 = vsel %vm989, %v1070, 0.0
          %v1113 = vadd.f32 %v1111, %v1112
          %v1114 = vsel %vm989, %v1071, 0.0
          %v1115 = vadd.f32 %v1113, %v1114
          %v1116 = vsel %vm989, %v1072, 0.0
          %v1117 = vadd.f32 %v1115, %v1116
          %v1118 = vsel %vm989, %v1073, 0.0
          %v1119 = vadd.f32 %v1117, %v1118
          %v1120 = vsel %vm989, %v1074, 0.0
          %v1121 = vadd.f32 %v1119, %v1120
          %v1122 = vsel %vm989, %v1075, 0.0
          %v1123 = vadd.f32 %v1121, %v1122
          %v1124 = vsel %vm989, %v1076, 0.0
          %v1125 = vadd.f32 %v1123, %v1124
          %v1126 = vsel %vm989, %v1077, 0.0
          %v1127 = vadd.f32 %v1125, %v1126
          %v1128 = vsel %vm989, %v1078, 0.0
          %v1129 = vadd.f32 %v1127, %v1128
          %v1130 = vsel %vm989, %v1079, 0.0
          %v1131 = vadd.f32 %v1129, %v1130
          %v1132 = vsel %vm989, %v1080, 0.0
          %v1133 = vadd.f32 %v1131, %v1132
          %v1134 = vsel %vm989, %v1081, 0.0
          %v1135 = vadd.f32 %v1133, %v1134
          %v1136 = vsel %vm989, %v1082, 0.0
          %v1137 = vadd.f32 %v1135, %v1136
          %v1138 = vsel %vm989, %v1083, 0.0
          %v1139 = vadd.f32 %v1137, %v1138
          %v1140 = vsel %vm989, %v1084, 0.0
          %v1141 = vadd.f32 %v1139, %v1140
          %v1142 = vsel %vm989, %v1085, 0.0
          %v1143 = vadd.f32 %v1141, %v1142
          %v1144 = vsel %vm989, %v1086, 0.0
          %v1145 = vadd.f32 %v1143, %v1144
          %v1146 = vsel %vm989, %v1087, 0.0
          %v1147 = vadd.f32 %v1145, %v1146
          %v1148 = vsel %vm989, %v1088, 0.0
          %v1149 = vadd.f32 %v1147, %v1148
          %v1150 = vsel %vm989, %v1089, 0.0
          %v1151 = vadd.f32 %v1149, %v1150
          %v1152 = vsel %vm989, %v1090, 0.0
          %v1153 = vadd.f32 %v1151, %v1152
          %v1154 = vrot.slane %v1153, 4
          %v1155 = vadd.f32 %v1153, %v1154
          %v1156 = vrot.slane %v1155, 2
          %v1157 = vadd.f32 %v1155, %v1156
          %v1158 = vrot.slane %v1157, 1
          %v1159 = vadd.f32 %v1157, %v1158
          %v1160 = vsel %vm609, %v1058, %v1159
          %vm1161 = vcmask 517120
          %1162 = vst.msk [vmem:[%s273] sm:$0x3] %vm1161, %v1160
        $region44: #{_matmul_padded.1} parent=31 // pred_fallthru
          _
        %s1163 = smul.u32 32, %s24
        %p1164 = scmp.lt.s32.totalorder %s1163, 63
        %s1165 = scalar_select %p1164, %s1163, 63
        %p1166 = scmp.lt.s32.totalorder %s25, 0
        %s1167 = scalar_select %p1166, %s25, 0
        %s1168 = sadd.s32 %s1167, %s1165
        %s1169 = smul.addr %s1168, 8
        %s1170 = scalar_lea.vmem %s3, %s1169
        %s1171 = sand.u32 %s158, 1
        %s1172 = scalar_lea.sflag [#allocation3], %s1171
        %s1173 = sand.u32 %s158, 1
        %s1174 = smul.addr %s1173, 2
        %s1175 = scalar_lea.vmem [#allocation2], %s1174
        // Predicated region
        $region45: #{_matmul_padded.1} parent=31 // pred_check
          %p1176 = pneg %p140
        $region46: #{_matmul_padded.1} parent=31 // pred_check_branch
          %1178 = sbr.rel (%p1176) target = $region48
        $region47: #{_matmul_padded.1} parent=31 // pred_region
          %s1179 = smul.u32 32, %s24
        $region48: #{_matmul_padded.1} parent=31 // pred_fallthru
          _
        // Predicated region
        $region49: #{_matmul_padded.1} parent=31 // pred_check
          %p1180 = pneg %p168
        $region50: #{_matmul_padded.1} parent=31 // pred_check_branch
          %1182 = sbr.rel (%p1180) target = $region52
        $region51: #{_matmul_padded.1} parent=31 // pred_region
          %s1184 = ssub.s32 32, 32
          %1185 = vsyncadd %s1172, %s1184
          %s1186 = sadd.s32 %s25, %s24
          %s1187 = smul.addr %s1186, 32
          %s1188 = scalar_lea.hbm %s4, %s1187
          %s1190 = sshll.u32 %s1175, 4
          %s1191 = int_to_ptr.vmem [resolvable:$true] %s1190
          %1193 = dma.vmem_to_hbm [thread:$0]  %s1191, 32, %s1188, %s1172
        $region52: #{_matmul_padded.1} parent=31 // pred_fallthru
          _
      $region32: #{_matmul_padded.1} parent=5 // pred_fallthru
        _
      %p1194 = scmp.le.s32.totalorder 2, %s14
      // Predicated region
      $region53: #{_matmul_padded.1} parent=5 // pred_check
        %p1195 = pneg %p1194
      $region54: #{_matmul_padded.1} parent=5 // pred_check_branch
        %1197 = sbr.rel (%p1195) target = $region56
      $region55: #{_matmul_padded.1} parent=5 // pred_region
        %s1198 = ssub.s32 %s14, 2
        // Predicated region
        $region57: #{_matmul_padded.1} parent=55 // pred_check
          %p1199 = pneg %p146
        $region58: #{_matmul_padded.1} parent=55 // pred_check_branch
          %1201 = sbr.rel (%p1199) target = $region60
        $region59: #{_matmul_padded.1} parent=55 // pred_region
          %s1202 = smul.u32 32, %s27
          %p1203 = scmp.lt.s32.totalorder %s1202, 63
          %s1204 = scalar_select %p1203, %s1202, 63
          %p1205 = scmp.lt.s32.totalorder %s28, 0
          %s1206 = scalar_select %p1205, %s28, 0
          %s1207 = sadd.s32 %s1206, %s1204
          %s1208 = smul.addr %s1207, 8
          %s1209 = scalar_lea.vmem %s3, %s1208
        $region60: #{_matmul_padded.1} parent=55 // pred_fallthru
          _
        // Predicated region
        $region61: #{_matmul_padded.1} parent=55 // pred_check
          %p1210 = pneg %p174
        $region62: #{_matmul_padded.1} parent=55 // pred_check_branch
          %1212 = sbr.rel (%p1210) target = $region64
        $region63: #{_matmul_padded.1} parent=55 // pred_region
          %s1213 = sand.u32 %s159, 1
          %s1214 = scalar_lea.sflag [#allocation3], %s1213
          %s1215 = sand.u32 %s159, 1
          %s1216 = smul.addr %s1215, 2
          %s1217 = scalar_lea.vmem [#allocation2], %s1216
          %1218 = dma.done %s1214, 32
        $region64: #{_matmul_padded.1} parent=55 // pred_fallthru
          _
      $region56: #{_matmul_padded.1} parent=5 // pred_fallthru
        _
    $region6: #{_matmul_padded.1} parent=1 // loop_footer
      %s18 = sadd.s32 1, %s14
    $region7: #{_matmul_padded.1} parent=1 // loop_footer_branch
      %13 = sbr.rel target = $region3
    $region8: #{_matmul_padded.1} parent=1 // loop_exit
      _
    %1219 = vsyncpa [#allocation3], 1
    %s1220 = scalar_lea.sflag [#allocation3], 1
    %1221 = vsyncpa %s1220, 1

</llo_original>
